<compile_context>
chip_gen: v7x
topology: tpu7x:2x2x1
jax: 0.10.0
libtpu: 0.0.40
codegen_flags: <defaults>
</compile_context>

<pallas_src>
import functools
import math

import jax
import jax.numpy as jnp
import numpy as np
from jax import lax
from jax.experimental import pallas as pl
from jax.experimental.pallas import tpu as pltpu


# ----------------------------------------------------------------------------
# Kernel 1: fused mask kernel (per batch).
#   qk = x @ [Wq|Wk] + [bq|bk]   (one wide matmul)
#   logits = (q * col_scale) <dot_general> k + b_eff
#   sig = sigmoid(logits); p = where(sig>0.5, sig, 0)*dm; n = where(<=0.5,...)*dm
#   masks stored bf16 (only the ==0 set is consumed downstream).
# ----------------------------------------------------------------------------
def _mask_kernel(feat_ref, wqk_ref, bqk_ref, cs_ref, beff_ref, dm_ref, masks_ref):
    x = feat_ref[0]                                                   # (S, D) f32
    D = x.shape[-1]
    qk = jnp.dot(x, wqk_ref[...], preferred_element_type=jnp.float32) + bqk_ref[...]
    q = qk[:, :D]
    k = qk[:, D:]
    qs = q * cs_ref[...]                                              # fold w_eff & 1/sqrt(dk)
    logits = lax.dot_general(qs, k, (((1,), (1,)), ((), ())),         # (S,S), no k.T
                             preferred_element_type=jnp.float32) + beff_ref[...]
    sig = jax.nn.sigmoid(logits)
    dm = dm_ref[0]
    zero = jnp.zeros_like(sig)
    masks_ref[0, 0] = (jnp.where(sig > 0.5, sig, zero) * dm).astype(masks_ref.dtype)
    masks_ref[1, 0] = (jnp.where(sig <= 0.5, sig, zero) * dm).astype(masks_ref.dtype)


def fused_masks(feature, w_qk, b_qk, col_scale, b_eff, data_mask):
    B, S, D = feature.shape
    return pl.pallas_call(
        _mask_kernel,
        out_shape=jax.ShapeDtypeStruct((2, B, S, S), jnp.bfloat16),
        grid=(B,),
        in_specs=[pl.BlockSpec((1, S, D), lambda b: (b, 0, 0)),
                  pl.BlockSpec((D, 2 * D), lambda b: (0, 0)),
                  pl.BlockSpec((1, 2 * D), lambda b: (0, 0)),
                  pl.BlockSpec((1, D), lambda b: (0, 0)),
                  pl.BlockSpec((1, 1), lambda b: (0, 0)),
                  pl.BlockSpec((1, S, S), lambda b: (b, 0, 0))],
        out_specs=pl.BlockSpec((2, 1, S, S), lambda b: (0, b, 0, 0)),
        compiler_params=pltpu.CompilerParams(dimension_semantics=("parallel",)),
    )(feature, w_qk, b_qk, col_scale, b_eff, data_mask)


# ----------------------------------------------------------------------------
# Kernel 2: fused QKV projection + dual masked attention.
#   grid = (branch, batch); per block: proj = x_bf16 @ W_qkv_bf16 (+b, f32 acc),
#   then per-head attention with a hoisted (m == 0) compare.  Context written
#   back bf16, lane-dense, concat-head layout.
# ----------------------------------------------------------------------------
def _qkv_attn_kernel(x_ref, wqkv_ref, bqkv_ref, mask_ref, ctx_ref,
                     *maybe_attn_ref, head):
    attn_ref = maybe_attn_ref[0] if maybe_attn_ref else None
    x = x_ref[0]                                                      # (S, D) bf16
    D = x.shape[-1]
    dk = D // head
    proj = (jnp.dot(x, wqkv_ref[0], preferred_element_type=jnp.float32)
            + bqkv_ref[0])                                            # (S, 3D) f32
    q = proj[:, :D].astype(jnp.bfloat16)
    k = proj[:, D:2 * D].astype(jnp.bfloat16)
    v = proj[:, 2 * D:].astype(jnp.bfloat16)

    is_masked = mask_ref[0, 0] == 0                                   # hoisted out of head loop
    neg = jnp.float32(-1e9)

    ctx_parts = []
    for h in range(head):                                             # static loop over heads
        lo, hi = h * dk, (h + 1) * dk
        s = lax.dot_general(q[:, lo:hi], k[:, lo:hi], (((1,), (1,)), ((), ())),
                            preferred_element_type=jnp.float32)       # (S,S), no kh.T
        s = jnp.where(is_masked, neg, s)
        s = s - jnp.max(s, axis=-1, keepdims=True)
        e = jnp.exp(s)
        p = e / jnp.sum(e, axis=-1, keepdims=True)                    # exact: p is returned
        ctx_parts.append(jnp.dot(p.astype(jnp.bfloat16), v[:, lo:hi],
                                 preferred_element_type=jnp.float32))
        if attn_ref is not None:
            attn_ref[0, 0, h] = p
    ctx_ref[0, 0] = jnp.concatenate(ctx_parts, axis=-1).astype(ctx_ref.dtype)


def dual_qkv_attention(feat_bf16, w_qkv, b_qkv, masks, head, return_attn=True):
    B, S, D = feat_bf16.shape
    kernel = functools.partial(_qkv_attn_kernel, head=head)
    in_specs = [pl.BlockSpec((1, S, D), lambda c, b: (b, 0, 0)),
                pl.BlockSpec((1, D, 3 * D), lambda c, b: (c, 0, 0)),
                pl.BlockSpec((1, 1, 3 * D), lambda c, b: (c, 0, 0)),
                pl.BlockSpec((1, 1, S, S), lambda c, b: (c, b, 0, 0))]
    ctx_shape = jax.ShapeDtypeStruct((2, B, S, D), jnp.bfloat16)
    ctx_spec = pl.BlockSpec((1, 1, S, D), lambda c, b: (c, b, 0, 0))
    # 48 MiB scoped VMEM: above the 16/32 MiB defaults, below physical on all gens.
    cp = pltpu.CompilerParams(dimension_semantics=("parallel", "parallel"),
                              vmem_limit_bytes=48 * 1024 * 1024)
    if return_attn:
        attn_shape = jax.ShapeDtypeStruct((2, B, head, S, S), jnp.float32)
        attn_spec = pl.BlockSpec((1, 1, head, S, S), lambda c, b: (c, b, 0, 0, 0))
        return pl.pallas_call(kernel, out_shape=(ctx_shape, attn_shape),
                              grid=(2, B), in_specs=in_specs,
                              out_specs=(ctx_spec, attn_spec),
                              compiler_params=cp)(feat_bf16, w_qkv, b_qkv, masks)
    return pl.pallas_call(kernel, out_shape=ctx_shape, grid=(2, B),
                          in_specs=in_specs, out_specs=ctx_spec,
                          compiler_params=cp)(feat_bf16, w_qkv, b_qkv, masks)


# ----------------------------------------------------------------------------
# Kernel 3: output gate with Wo folded into [w_v | w_g] (wrapper-side).
#   [vp|ep] = ctx_p @ W'_p + b'_p ; [vn|en] = ctx_n @ W'_n + b'_n
#   out = softmax2(ep,en) blend of (vp, vn)
# ----------------------------------------------------------------------------
def _out_gate_kernel(ctx_ref, w_ref, b_ref, o_ref):
    D = o_ref.shape[-1]
    pg = jnp.dot(ctx_ref[0], w_ref[0], preferred_element_type=jnp.float32) + b_ref[0]
    ng = jnp.dot(ctx_ref[1], w_ref[1], preferred_element_type=jnp.float32) + b_ref[1]
    vp, ep = pg[:, :D], pg[:, D:]
    vn, en = ng[:, :D], ng[:, D:]
    mm = jnp.maximum(ep, en)
    ea = jnp.exp(ep - mm)
    eb = jnp.exp(en - mm)
    o_ref[...] = (vp * ea + vn * eb) * pl.reciprocal(ea + eb, approx=True)


def out_gate(ctx, w_fold, b_fold, tm=512):
    # tm=512 per review for v5e/v6e HBM roofline; shrink to 256 on v7x if the
    # bf16 weight stack + row tiles approach the 64 MiB VMEM budget.
    _, M, D = ctx.shape
    TM = M if M <= tm else tm
    return pl.pallas_call(
        _out_gate_kernel,
        out_shape=jax.ShapeDtypeStruct((M, D), jnp.float32),
        grid=(pl.cdiv(M, TM),),
        in_specs=[pl.BlockSpec((2, TM, D), lambda i: (0, i, 0)),
                  pl.BlockSpec((2, D, 2 * D), lambda i: (0, 0, 0)),
                  pl.BlockSpec((2, 1, 2 * D), lambda i: (0, 0, 0))],
        out_specs=pl.BlockSpec((TM, D), lambda i: (i, 0)),
        compiler_params=pltpu.CompilerParams(dimension_semantics=("parallel",)),
    )(ctx, w_fold, b_fold)


# ----------------------------------------------------------------------------
# Forward wrapper (glue: weight folding / dtype casts / reshapes only).
# ----------------------------------------------------------------------------
def com_attention_forward(params, feature, data_mask, head, pm=None, nm=None,
                          return_attn=True):
    B, S, D = feature.shape
    dk = D // head
    scale = 1.0 / math.sqrt(dk)
    f = params["fusion"]

    # Collapse the three 1x1 convs (affine, no nonlinearity between them).
    w_eff = (f["w1"] @ f["w2"] @ f["w3"]).reshape(head)                     # (H,)
    b_eff = f["b1"] @ f["w2"] @ f["w3"] + f["b2"] @ f["w3"] + f["b3"]       # (1,1)
    col_scale = (jnp.repeat(w_eff, dk) * scale).reshape(1, D)               # (1,D)

    # Fusion q/k projections concatenated -> single wide matmul (kept f32).
    w_qk = jnp.concatenate([params["wq"], params["wk"]], axis=1)            # (D,2D)
    b_qk = jnp.concatenate([params["bq"], params["bk"]], axis=1)            # (1,2D)

    masks = fused_masks(feature, w_qk, b_qk, col_scale, b_eff, data_mask)   # (2,B,S,S) bf16

    # Both branches' QKV weights stacked (bf16); 1/sqrt(dk) folded into Wq/bq.
    def qkv_w(pp):
        return jnp.concatenate([pp["wq"] * scale, pp["wk"], pp["wv"]], axis=1)

    def qkv_b(pp):
        return jnp.concatenate([pp["bq"] * scale, pp["bk"], pp["bv"]], axis=1)

    w_qkv = jnp.stack([qkv_w(params["p_attn"]), qkv_w(params["n_attn"])], 0
                      ).astype(jnp.bfloat16)                                # (2,D,3D) bf16
    b_qkv = jnp.stack([qkv_b(params["p_attn"]), qkv_b(params["n_attn"])], 0)  # (2,1,3D) f32

    feat_bf16 = feature.astype(jnp.bfloat16)
    if return_attn:
        ctx, attn = dual_qkv_attention(feat_bf16, w_qkv, b_qkv, masks, head, True)
        pm_out, nm_out = attn[0], attn[1]
    else:
        ctx = dual_qkv_attention(feat_bf16, w_qkv, b_qkv, masks, head, False)
        pm_out, nm_out = pm, nm

    # Fold Wo into [w_v | w_g]:  (ctx@Wo+bo)@[Wv|Wg]+[bv|bg] == ctx@W' + b'.
    def vg_fold(pp, w_v, b_v, w_g, b_g):
        w_vg = jnp.concatenate([w_v, w_g], axis=1)                          # (D,2D)
        b_vg = jnp.concatenate([b_v, b_g], axis=1)                          # (1,2D)
        return pp["wo"] @ w_vg, pp["bo"] @ w_vg + b_vg

    wp, bp = vg_fold(params["p_attn"], params["w_vp"], params["b_vp"],
                     params["w_gp"], params["b_gp"])
    wn, bn = vg_fold(params["n_attn"], params["w_vn"], params["b_vn"],
                     params["w_gp"], params["b_gp"])   # gate_p reused: bug-for-bug
    w_fold = jnp.stack([wp, wn], 0).astype(jnp.bfloat16)                    # (2,D,2D)
    b_fold = jnp.stack([bp, bn], 0)                                         # (2,1,2D)

    out = out_gate(ctx.reshape(2, B * S, D), w_fold, b_fold).reshape(B, S, D)
    return out, pm_out, nm_out


# ----------------------------------------------------------------------------
# Deterministic parameter init (shapes follow the PyTorch __init__)
# ----------------------------------------------------------------------------
def init_params(key, head, d_model):
    keys = iter(jax.random.split(key, 32))

    def lin(din, dout, s=0.1):
        k1, k2 = jax.random.split(next(keys))
        return (jax.random.normal(k1, (din, dout), jnp.float32) * s,
                jax.random.normal(k2, (1, dout), jnp.float32) * s)

    wq, bq = lin(d_model, d_model)            # q_liner
    wk, bk = lin(d_model, d_model)            # k_liner
    w1, b1 = lin(head, 2 * head)              # Conv2d(H, 2H, 1)  (channels-last weights)
    w2, b2 = lin(2 * head, head)              # Conv2d(2H, H, 1)
    w3, b3 = lin(head, 1)                     # Conv2d(H, 1, 1)

    def mha_params():
        p = {}
        for name in ("q", "k", "v", "o"):
            w, b = lin(d_model, d_model)
            p["w" + name] = w
            p["b" + name] = b
        return p

    w_gn, b_gn = lin(d_model, d_model)        # gate_n (dead in forward; kept for parity)
    w_gp, b_gp = lin(d_model, d_model)        # gate_p
    w_vn, b_vn = lin(d_model, d_model)        # v_n
    w_vp, b_vp = lin(d_model, d_model)        # v_p

    return dict(
        wq=wq, bq=bq, wk=wk, bk=bk,
        fusion=dict(w1=w1, b1=b1, w2=w2, b2=b2, w3=w3, b3=b3),
        p_attn=mha_params(), n_attn=mha_params(),
        w_gn=w_gn, b_gn=b_gn, w_gp=w_gp, b_gp=b_gp,
        w_vn=w_vn, b_vn=b_vn, w_vp=w_vp, b_vp=b_vp,
    )


# ----------------------------------------------------------------------------
# Pure-JAX f32 reference (mirrors the PyTorch forward step by step)
# ----------------------------------------------------------------------------
def _reference(params, feature, data_mask, head):
    B, S, D = feature.shape
    dk = D // head

    def lin(x, w, b):
        return x @ w + b

    def split_heads(x):
        return x.reshape(B, S, head, dk).transpose(0, 2, 1, 3)

    q = split_heads(lin(feature, params["wq"], params["bq"]))
    k = split_heads(lin(feature, params["wk"], params["bk"]))
    scores = jnp.einsum("bhqd,bhkd->bhqk", q, k) / math.sqrt(dk)
    f = params["fusion"]
    h = scores.transpose(0, 2, 3, 1) @ f["w1"] + f["b1"]
    h = h @ f["w2"] + f["b2"]
    h = h @ f["w3"] + f["b3"]
    sig = jax.nn.sigmoid(h)[..., 0]
    p_mask = jnp.where(sig > 0.5, sig, 0.0)
    n_mask = jnp.where(sig <= 0.5, sig, 0.0)

    def mha(x, mask, pp):
        qq = split_heads(lin(x, pp["wq"], pp["bq"]))
        kk = split_heads(lin(x, pp["wk"], pp["bk"]))
        vv = split_heads(lin(x, pp["wv"], pp["bv"]))
        s = jnp.einsum("bhqd,bhkd->bhqk", qq, kk) / math.sqrt(dk)
        s = jnp.where(mask[:, None] == 0.0, -1e9, s)
        a = jax.nn.softmax(s, axis=-1)
        ctx = jnp.einsum("bhqk,bhkd->bhqd", a, vv)
        ctx = ctx.transpose(0, 2, 1, 3).reshape(B, S, D)
        return lin(ctx, pp["wo"], pp["bo"]), a

    p, pm = mha(feature, p_mask * data_mask, params["p_attn"])
    n, nm = mha(feature, n_mask * data_mask, params["n_attn"])
    vp = lin(p, params["w_vp"], params["b_vp"])
    vn = lin(n, params["w_vn"], params["b_vn"])
    ep = lin(p, params["w_gp"], params["b_gp"])
    en = lin(n, params["w_gp"], params["b_gp"])
    e = jax.nn.softmax(jnp.stack([ep, en], 0), axis=0)
    return jnp.sum(jnp.stack([vp, vn], 0) * e, axis=0), pm, nm


if __name__ == "__main__":
    B, S, D, HEAD = 2, 8, 32, 4
    key = jax.random.PRNGKey(0)
    kf, kp = jax.random.split(key)

    feature = jax.random.normal(kf, (B, S, D), jnp.float32)
    data_mask = jnp.ones((B, S, S), jnp.float32).at[1, :, S - 1].set(0.0)
    params = init_params(kp, HEAD, D)

    fwd = jax.jit(com_attention_forward, static_argnames=("head", "return_attn"))

    out, pm, nm = fwd(params, feature, data_mask, head=HEAD)
    jax.block_until_ready((out, pm, nm))

    assert out.shape == (B, S, D)
    assert pm.shape == (B, HEAD, S, S)
    assert nm.shape == (B, HEAD, S, S)

    ref_out, ref_pm, ref_nm = _reference(params, feature, data_mask, HEAD)
    # bf16 MXU operands (f32 accumulate) -> compare against the f32 reference
    # at a bf16-appropriate tolerance.
    TOL = dict(atol=2e-2, rtol=2e-2)
    np.testing.assert_allclose(np.asarray(out), np.asarray(ref_out), **TOL)
    np.testing.assert_allclose(np.asarray(pm), np.asarray(ref_pm), **TOL)
    np.testing.assert_allclose(np.asarray(nm), np.asarray(ref_nm), **TOL)

    # Fast path: skip writing the (2,B,H,S,S) attention maps to HBM.
    out2, _, _ = fwd(params, feature, data_mask, head=HEAD, return_attn=False)
    out2 = jax.block_until_ready(out2)
    np.testing.assert_allclose(np.asarray(out2), np.asarray(ref_out), **TOL)

    print("KERNEL_OK")
</pallas_src>

<mosaic_0001>
module attributes {stable_mosaic.version = 11 : i64} {
  func.func @_mask_kernel(%arg0: i32, %arg1: memref<1x8x32xf32, #tpu.memory_space<vmem>>, %arg2: memref<32x64xf32, #tpu.memory_space<vmem>>, %arg3: memref<1x64xf32, #tpu.memory_space<vmem>>, %arg4: memref<1x32xf32, #tpu.memory_space<vmem>>, %arg5: memref<1x1xf32, #tpu.memory_space<vmem>>, %arg6: memref<1x8x8xf32, #tpu.memory_space<vmem>>, %arg7: memref<2x1x8x8xbf16, #tpu.memory_space<vmem>>) attributes {dimension_semantics = [#tpu.dimension_semantics<parallel>], iteration_bounds = array<i64: 2>, scalar_prefetch = 0 : i64, scratch_operands = 0 : i64, tpu.core_type = #tpu.core_type<tc>, window_params = [{transform_indices = @transform_0, window_bounds = array<i64: 1, 8, 32>}, {pipeline_mode = #tpu.pipeline_mode<synchronous>, transform_indices = @transform_1, window_bounds = array<i64: 32, 64>}, {pipeline_mode = #tpu.pipeline_mode<synchronous>, transform_indices = @transform_2, window_bounds = array<i64: 1, 64>}, {pipeline_mode = #tpu.pipeline_mode<synchronous>, transform_indices = @transform_3, window_bounds = array<i64: 1, 32>}, {pipeline_mode = #tpu.pipeline_mode<synchronous>, transform_indices = @transform_4, window_bounds = array<i64: 1, 1>}, {transform_indices = @transform_5, window_bounds = array<i64: 1, 8, 8>}, {transform_indices = @transform_6, window_bounds = array<i64: 2, 1, 8, 8>}]} {
    %c0 = arith.constant 0 : index
    %c0_0 = arith.constant 0 : index
    %c0_1 = arith.constant 0 : index
    %0 = vector.load %arg1[%c0, %c0_0, %c0_1] : memref<1x8x32xf32, #tpu.memory_space<vmem>>, vector<1x8x32xf32>
    %1 = vector.shape_cast %0 : vector<1x8x32xf32> to vector<8x32xf32>
    %c0_2 = arith.constant 0 : index
    %c0_3 = arith.constant 0 : index
    %2 = vector.load %arg2[%c0_2, %c0_3] : memref<32x64xf32, #tpu.memory_space<vmem>>, vector<32x64xf32>
    %cst = arith.constant dense<0.000000e+00> : vector<8x64xf32>
    %3 = tpu.matmul %1, %2, %cst {dimension_numbers = #tpu.dot_dimension_numbers<[1], [0], [0], [1], [0, 0, 1, 1], [], []>} : vector<8x32xf32>, vector<32x64xf32>, vector<8x64xf32> -> vector<8x64xf32>
    %c0_4 = arith.constant 0 : index
    %c0_5 = arith.constant 0 : index
    %4 = vector.load %arg3[%c0_4, %c0_5] : memref<1x64xf32, #tpu.memory_space<vmem>>, vector<1x64xf32>
    %5 = vector.broadcast %4 : vector<1x64xf32> to vector<8x64xf32>
    %6 = arith.addf %3, %5 : vector<8x64xf32>
    %7 = vector.extract_strided_slice %6 {offsets = [0, 0], sizes = [8, 32], strides = [1, 1]} : vector<8x64xf32> to vector<8x32xf32>
    %8 = vector.extract_strided_slice %6 {offsets = [0, 32], sizes = [8, 32], strides = [1, 1]} : vector<8x64xf32> to vector<8x32xf32>
    %c0_6 = arith.constant 0 : index
    %c0_7 = arith.constant 0 : index
    %9 = vector.load %arg4[%c0_6, %c0_7] : memref<1x32xf32, #tpu.memory_space<vmem>>, vector<1x32xf32>
    %10 = vector.broadcast %9 : vector<1x32xf32> to vector<8x32xf32>
    %11 = arith.mulf %7, %10 : vector<8x32xf32>
    %cst_8 = arith.constant dense<0.000000e+00> : vector<8x8xf32>
    %12 = tpu.matmul %11, %8, %cst_8 {dimension_numbers = #tpu.dot_dimension_numbers<[1], [1], [0], [0], [0, 0, 1, 0], [], []>} : vector<8x32xf32>, vector<8x32xf32>, vector<8x8xf32> -> vector<8x8xf32>
    %c0_9 = arith.constant 0 : index
    %c0_10 = arith.constant 0 : index
    %13 = vector.load %arg5[%c0_9, %c0_10] : memref<1x1xf32, #tpu.memory_space<vmem>>, vector<1x1xf32>
    %14 = vector.broadcast %13 : vector<1x1xf32> to vector<8x8xf32>
    %15 = arith.addf %12, %14 : vector<8x8xf32>
    %16 = arith.negf %15 : vector<8x8xf32>
    %17 = math.exp %16 : vector<8x8xf32>
    %cst_11 = arith.constant 1.000000e+00 : f32
    %18 = vector.broadcast %cst_11 : f32 to vector<8x8xf32>
    %19 = arith.addf %18, %17 : vector<8x8xf32>
    %20 = arith.divf %18, %19 : vector<8x8xf32>
    %c0_12 = arith.constant 0 : index
    %c0_13 = arith.constant 0 : index
    %c0_14 = arith.constant 0 : index
    %21 = vector.load %arg6[%c0_12, %c0_13, %c0_14] : memref<1x8x8xf32, #tpu.memory_space<vmem>>, vector<1x8x8xf32>
    %22 = vector.shape_cast %21 : vector<1x8x8xf32> to vector<8x8xf32>
    %cst_15 = arith.constant 0.000000e+00 : f32
    %23 = vector.broadcast %cst_15 : f32 to vector<8x8xf32>
    %cst_16 = arith.constant 5.000000e-01 : f32
    %24 = vector.broadcast %cst_16 : f32 to vector<8x8xf32>
    %25 = arith.cmpf ogt, %20, %24 : vector<8x8xf32>
    %26 = arith.select %25, %20, %23 : vector<8x8xi1>, vector<8x8xf32>
    %27 = arith.mulf %26, %22 : vector<8x8xf32>
    %28 = arith.truncf %27 : vector<8x8xf32> to vector<8x8xbf16>
    %c0_17 = arith.constant 0 : index
    %c0_18 = arith.constant 0 : index
    %c0_19 = arith.constant 0 : index
    %c0_20 = arith.constant 0 : index
    %29 = vector.load %arg7[%c0_17, %c0_18, %c0_19, %c0_20] : memref<2x1x8x8xbf16, #tpu.memory_space<vmem>>, vector<1x1x8x8xbf16>
    %30 = vector.shape_cast %29 : vector<1x1x8x8xbf16> to vector<8x8xbf16>
    %31 = vector.shape_cast %28 : vector<8x8xbf16> to vector<1x1x8x8xbf16>
    tpu.vector_store %arg7[%c0_17, %c0_18, %c0_19, %c0_20], %31 {strides = array<i32>} : memref<2x1x8x8xbf16, #tpu.memory_space<vmem>>, vector<1x1x8x8xbf16>,
    %cst_21 = arith.constant 5.000000e-01 : f32
    %32 = vector.broadcast %cst_21 : f32 to vector<8x8xf32>
    %33 = arith.cmpf ole, %20, %32 : vector<8x8xf32>
    %34 = arith.select %33, %20, %23 : vector<8x8xi1>, vector<8x8xf32>
    %35 = arith.mulf %34, %22 : vector<8x8xf32>
    %36 = arith.truncf %35 : vector<8x8xf32> to vector<8x8xbf16>
    %c1 = arith.constant 1 : index
    %c0_22 = arith.constant 0 : index
    %c0_23 = arith.constant 0 : index
    %c0_24 = arith.constant 0 : index
    %37 = vector.load %arg7[%c1, %c0_22, %c0_23, %c0_24] : memref<2x1x8x8xbf16, #tpu.memory_space<vmem>>, vector<1x1x8x8xbf16>
    %38 = vector.shape_cast %37 : vector<1x1x8x8xbf16> to vector<8x8xbf16>
    %39 = vector.shape_cast %36 : vector<8x8xbf16> to vector<1x1x8x8xbf16>
    tpu.vector_store %arg7[%c1, %c0_22, %c0_23, %c0_24], %39 {strides = array<i32>} : memref<2x1x8x8xbf16, #tpu.memory_space<vmem>>, vector<1x1x8x8xbf16>,
    return
  }
  func.func @transform_0(%arg0: i32) -> (i32, i32, i32) {
    %c0_i32 = arith.constant 0 : i32
    %c0_i32_0 = arith.constant 0 : i32
    %c0_i32_1 = arith.constant 0 : i32
    return %arg0, %c0_i32, %c0_i32_0 : i32, i32, i32
  }
  func.func @transform_1(%arg0: i32) -> (i32, i32) {
    %c0_i32 = arith.constant 0 : i32
    %c0_i32_0 = arith.constant 0 : i32
    %c0_i32_1 = arith.constant 0 : i32
    return %c0_i32, %c0_i32_0 : i32, i32
  }
  func.func @transform_2(%arg0: i32) -> (i32, i32) {
    %c0_i32 = arith.constant 0 : i32
    %c0_i32_0 = arith.constant 0 : i32
    %c0_i32_1 = arith.constant 0 : i32
    return %c0_i32, %c0_i32_0 : i32, i32
  }
  func.func @transform_3(%arg0: i32) -> (i32, i32) {
    %c0_i32 = arith.constant 0 : i32
    %c0_i32_0 = arith.constant 0 : i32
    %c0_i32_1 = arith.constant 0 : i32
    return %c0_i32, %c0_i32_0 : i32, i32
  }
  func.func @transform_4(%arg0: i32) -> (i32, i32) {
    %c0_i32 = arith.constant 0 : i32
    %c0_i32_0 = arith.constant 0 : i32
    %c0_i32_1 = arith.constant 0 : i32
    return %c0_i32, %c0_i32_0 : i32, i32
  }
  func.func @transform_5(%arg0: i32) -> (i32, i32, i32) {
    %c0_i32 = arith.constant 0 : i32
    %c0_i32_0 = arith.constant 0 : i32
    %c0_i32_1 = arith.constant 0 : i32
    return %arg0, %c0_i32, %c0_i32_0 : i32, i32, i32
  }
  func.func @transform_6(%arg0: i32) -> (i32, i32, i32, i32) {
    %c0_i32 = arith.constant 0 : i32
    %c0_i32_0 = arith.constant 0 : i32
    %c0_i32_1 = arith.constant 0 : i32
    %c0_i32_2 = arith.constant 0 : i32
    return %c0_i32, %arg0, %c0_i32_0, %c0_i32_1 : i32, i32, i32, i32
  }
}

module attributes {stable_mosaic.version = 11 : i64} {
  func.func @_out_gate_kernel(%arg0: i32, %arg1: memref<2x16x32xbf16, #tpu.memory_space<vmem>>, %arg2: memref<2x32x64xbf16, #tpu.memory_space<vmem>>, %arg3: memref<2x1x64xf32, #tpu.memory_space<vmem>>, %arg4: memref<16x32xf32, #tpu.memory_space<vmem>>) attributes {dimension_semantics = [#tpu.dimension_semantics<parallel>], iteration_bounds = array<i64: 1>, scalar_prefetch = 0 : i64, scratch_operands = 0 : i64, tpu.core_type = #tpu.core_type<tc>, window_params = [{transform_indices = @transform_0, window_bounds = array<i64: 2, 16, 32>}, {pipeline_mode = #tpu.pipeline_mode<synchronous>, transform_indices = @transform_1, window_bounds = array<i64: 2, 32, 64>}, {pipeline_mode = #tpu.pipeline_mode<synchronous>, transform_indices = @transform_2, window_bounds = array<i64: 2, 1, 64>}, {transform_indices = @transform_3, window_bounds = array<i64: 16, 32>}]} {
    %c0 = arith.constant 0 : index
    %c0_0 = arith.constant 0 : index
    %c0_1 = arith.constant 0 : index
    %0 = vector.load %arg1[%c0, %c0_0, %c0_1] : memref<2x16x32xbf16, #tpu.memory_space<vmem>>, vector<1x16x32xbf16>
    %1 = vector.shape_cast %0 : vector<1x16x32xbf16> to vector<16x32xbf16>
    %c0_2 = arith.constant 0 : index
    %c0_3 = arith.constant 0 : index
    %c0_4 = arith.constant 0 : index
    %2 = vector.load %arg2[%c0_2, %c0_3, %c0_4] : memref<2x32x64xbf16, #tpu.memory_space<vmem>>, vector<1x32x64xbf16>
    %3 = vector.shape_cast %2 : vector<1x32x64xbf16> to vector<32x64xbf16>
    %cst = arith.constant dense<0.000000e+00> : vector<16x64xf32>
    %4 = tpu.matmul %1, %3, %cst {dimension_numbers = #tpu.dot_dimension_numbers<[1], [0], [0], [1], [0, 0, 1, 1], [], []>} : vector<16x32xbf16>, vector<32x64xbf16>, vector<16x64xf32> -> vector<16x64xf32>
    %c0_5 = arith.constant 0 : index
    %c0_6 = arith.constant 0 : index
    %c0_7 = arith.constant 0 : index
    %5 = vector.load %arg3[%c0_5, %c0_6, %c0_7] : memref<2x1x64xf32, #tpu.memory_space<vmem>>, vector<1x1x64xf32>
    %6 = vector.shape_cast %5 : vector<1x1x64xf32> to vector<1x64xf32>
    %7 = vector.broadcast %6 : vector<1x64xf32> to vector<16x64xf32>
    %8 = arith.addf %4, %7 : vector<16x64xf32>
    %c1 = arith.constant 1 : index
    %c0_8 = arith.constant 0 : index
    %c0_9 = arith.constant 0 : index
    %9 = vector.load %arg1[%c1, %c0_8, %c0_9] : memref<2x16x32xbf16, #tpu.memory_space<vmem>>, vector<1x16x32xbf16>
    %10 = vector.shape_cast %9 : vector<1x16x32xbf16> to vector<16x32xbf16>
    %c1_10 = arith.constant 1 : index
    %c0_11 = arith.constant 0 : index
    %c0_12 = arith.constant 0 : index
    %11 = vector.load %arg2[%c1_10, %c0_11, %c0_12] : memref<2x32x64xbf16, #tpu.memory_space<vmem>>, vector<1x32x64xbf16>
    %12 = vector.shape_cast %11 : vector<1x32x64xbf16> to vector<32x64xbf16>
    %cst_13 = arith.constant dense<0.000000e+00> : vector<16x64xf32>
    %13 = tpu.matmul %10, %12, %cst_13 {dimension_numbers = #tpu.dot_dimension_numbers<[1], [0], [0], [1], [0, 0, 1, 1], [], []>} : vector<16x32xbf16>, vector<32x64xbf16>, vector<16x64xf32> -> vector<16x64xf32>
    %c1_14 = arith.constant 1 : index
    %c0_15 = arith.constant 0 : index
    %c0_16 = arith.constant 0 : index
    %14 = vector.load %arg3[%c1_14, %c0_15, %c0_16] : memref<2x1x64xf32, #tpu.memory_space<vmem>>, vector<1x1x64xf32>
    %15 = vector.shape_cast %14 : vector<1x1x64xf32> to vector<1x64xf32>
    %16 = vector.broadcast %15 : vector<1x64xf32> to vector<16x64xf32>
    %17 = arith.addf %13, %16 : vector<16x64xf32>
    %18 = vector.extract_strided_slice %8 {offsets = [0, 0], sizes = [16, 32], strides = [1, 1]} : vector<16x64xf32> to vector<16x32xf32>
    %19 = vector.extract_strided_slice %8 {offsets = [0, 32], sizes = [16, 32], strides = [1, 1]} : vector<16x64xf32> to vector<16x32xf32>
    %20 = vector.extract_strided_slice %17 {offsets = [0, 0], sizes = [16, 32], strides = [1, 1]} : vector<16x64xf32> to vector<16x32xf32>
    %21 = vector.extract_strided_slice %17 {offsets = [0, 32], sizes = [16, 32], strides = [1, 1]} : vector<16x64xf32> to vector<16x32xf32>
    %22 = arith.maximumf %19, %21 : vector<16x32xf32>
    %23 = arith.subf %19, %22 : vector<16x32xf32>
    %24 = math.exp %23 : vector<16x32xf32>
    %25 = arith.subf %21, %22 : vector<16x32xf32>
    %26 = math.exp %25 : vector<16x32xf32>
    %27 = arith.mulf %18, %24 : vector<16x32xf32>
    %28 = arith.mulf %20, %26 : vector<16x32xf32>
    %29 = arith.addf %27, %28 : vector<16x32xf32>
    %30 = arith.addf %24, %26 : vector<16x32xf32>
    %31 = tpu.reciprocal %30 {approx = true} : vector<16x32xf32> -> vector<16x32xf32>
    %32 = arith.mulf %29, %31 : vector<16x32xf32>
    %c0_17 = arith.constant 0 : index
    %c0_18 = arith.constant 0 : index
    %33 = vector.load %arg4[%c0_17, %c0_18] : memref<16x32xf32, #tpu.memory_space<vmem>>, vector<16x32xf32>
    tpu.vector_store %arg4[%c0_17, %c0_18], %32 {strides = array<i32>} : memref<16x32xf32, #tpu.memory_space<vmem>>, vector<16x32xf32>,
    return
  }
  func.func @transform_0(%arg0: i32) -> (i32, i32, i32) {
    %c0_i32 = arith.constant 0 : i32
    %c0_i32_0 = arith.constant 0 : i32
    %c0_i32_1 = arith.constant 0 : i32
    return %c0_i32, %arg0, %c0_i32_0 : i32, i32, i32
  }
  func.func @transform_1(%arg0: i32) -> (i32, i32, i32) {
    %c0_i32 = arith.constant 0 : i32
    %c0_i32_0 = arith.constant 0 : i32
    %c0_i32_1 = arith.constant 0 : i32
    %c0_i32_2 = arith.constant 0 : i32
    return %c0_i32, %c0_i32_0, %c0_i32_1 : i32, i32, i32
  }
  func.func @transform_2(%arg0: i32) -> (i32, i32, i32) {
    %c0_i32 = arith.constant 0 : i32
    %c0_i32_0 = arith.constant 0 : i32
    %c0_i32_1 = arith.constant 0 : i32
    %c0_i32_2 = arith.constant 0 : i32
    return %c0_i32, %c0_i32_0, %c0_i32_1 : i32, i32, i32
  }
  func.func @transform_3(%arg0: i32) -> (i32, i32) {
    %c0_i32 = arith.constant 0 : i32
    %c0_i32_0 = arith.constant 0 : i32
    return %arg0, %c0_i32 : i32, i32
  }
}

module attributes {stable_mosaic.version = 11 : i64} {
  func.func @_qkv_attn_kernel(%arg0: i32, %arg1: i32, %arg2: memref<1x8x32xbf16, #tpu.memory_space<vmem>>, %arg3: memref<1x32x96xbf16, #tpu.memory_space<vmem>>, %arg4: memref<1x1x96xf32, #tpu.memory_space<vmem>>, %arg5: memref<1x1x8x8xbf16, #tpu.memory_space<vmem>>, %arg6: memref<1x1x8x32xbf16, #tpu.memory_space<vmem>>, %arg7: memref<1x1x4x8x8xf32, #tpu.memory_space<vmem>>) attributes {dimension_semantics = [#tpu.dimension_semantics<parallel>, #tpu.dimension_semantics<parallel>], iteration_bounds = array<i64: 2, 2>, scalar_prefetch = 0 : i64, scratch_operands = 0 : i64, tpu.core_type = #tpu.core_type<tc>, window_params = [{transform_indices = @transform_0, window_bounds = array<i64: 1, 8, 32>}, {transform_indices = @transform_1, window_bounds = array<i64: 1, 32, 96>}, {transform_indices = @transform_2, window_bounds = array<i64: 1, 1, 96>}, {transform_indices = @transform_3, window_bounds = array<i64: 1, 1, 8, 8>}, {transform_indices = @transform_4, window_bounds = array<i64: 1, 1, 8, 32>}, {transform_indices = @transform_5, window_bounds = array<i64: 1, 1, 4, 8, 8>}]} {
    %c0 = arith.constant 0 : index
    %c0_0 = arith.constant 0 : index
    %c0_1 = arith.constant 0 : index
    %0 = vector.load %arg2[%c0, %c0_0, %c0_1] : memref<1x8x32xbf16, #tpu.memory_space<vmem>>, vector<1x8x32xbf16>
    %1 = vector.shape_cast %0 : vector<1x8x32xbf16> to vector<8x32xbf16>
    %c0_2 = arith.constant 0 : index
    %c0_3 = arith.constant 0 : index
    %c0_4 = arith.constant 0 : index
    %2 = vector.load %arg3[%c0_2, %c0_3, %c0_4] : memref<1x32x96xbf16, #tpu.memory_space<vmem>>, vector<1x32x96xbf16>
    %3 = vector.shape_cast %2 : vector<1x32x96xbf16> to vector<32x96xbf16>
    %cst = arith.constant dense<0.000000e+00> : vector<8x96xf32>
    %4 = tpu.matmul %1, %3, %cst {dimension_numbers = #tpu.dot_dimension_numbers<[1], [0], [0], [1], [0, 0, 1, 1], [], []>} : vector<8x32xbf16>, vector<32x96xbf16>, vector<8x96xf32> -> vector<8x96xf32>
    %c0_5 = arith.constant 0 : index
    %c0_6 = arith.constant 0 : index
    %c0_7 = arith.constant 0 : index
    %5 = vector.load %arg4[%c0_5, %c0_6, %c0_7] : memref<1x1x96xf32, #tpu.memory_space<vmem>>, vector<1x1x96xf32>
    %6 = vector.shape_cast %5 : vector<1x1x96xf32> to vector<1x96xf32>
    %7 = vector.broadcast %6 : vector<1x96xf32> to vector<8x96xf32>
    %8 = arith.addf %4, %7 : vector<8x96xf32>
    %9 = vector.extract_strided_slice %8 {offsets = [0, 0], sizes = [8, 32], strides = [1, 1]} : vector<8x96xf32> to vector<8x32xf32>
    %10 = arith.truncf %9 : vector<8x32xf32> to vector<8x32xbf16>
    %11 = vector.extract_strided_slice %8 {offsets = [0, 32], sizes = [8, 32], strides = [1, 1]} : vector<8x96xf32> to vector<8x32xf32>
    %12 = arith.truncf %11 : vector<8x32xf32> to vector<8x32xbf16>
    %13 = vector.extract_strided_slice %8 {offsets = [0, 64], sizes = [8, 32], strides = [1, 1]} : vector<8x96xf32> to vector<8x32xf32>
    %14 = arith.truncf %13 : vector<8x32xf32> to vector<8x32xbf16>
    %c0_8 = arith.constant 0 : index
    %c0_9 = arith.constant 0 : index
    %c0_10 = arith.constant 0 : index
    %c0_11 = arith.constant 0 : index
    %15 = vector.load %arg5[%c0_8, %c0_9, %c0_10, %c0_11] : memref<1x1x8x8xbf16, #tpu.memory_space<vmem>>, vector<1x1x8x8xbf16>
    %16 = vector.shape_cast %15 : vector<1x1x8x8xbf16> to vector<8x8xbf16>
    %cst_12 = arith.constant 0.000000e+00 : bf16
    %17 = vector.broadcast %cst_12 : bf16 to vector<8x8xbf16>
    %18 = arith.cmpf oeq, %16, %17 : vector<8x8xbf16>
    %19 = vector.extract_strided_slice %10 {offsets = [0, 0], sizes = [8, 8], strides = [1, 1]} : vector<8x32xbf16> to vector<8x8xbf16>
    %20 = vector.extract_strided_slice %12 {offsets = [0, 0], sizes = [8, 8], strides = [1, 1]} : vector<8x32xbf16> to vector<8x8xbf16>
    %cst_13 = arith.constant dense<0.000000e+00> : vector<8x8xf32>
    %21 = tpu.matmul %19, %20, %cst_13 {dimension_numbers = #tpu.dot_dimension_numbers<[1], [1], [0], [0], [0, 0, 1, 0], [], []>} : vector<8x8xbf16>, vector<8x8xbf16>, vector<8x8xf32> -> vector<8x8xf32>
    %cst_14 = arith.constant -1.000000e+09 : f32
    %22 = vector.broadcast %cst_14 : f32 to vector<8x8xf32>
    %23 = arith.select %18, %22, %21 : vector<8x8xi1>, vector<8x8xf32>
    %cst_15 = arith.constant dense<0xFF800000> : vector<8xf32>
    %24 = vector.multi_reduction <maximumf>, %23, %cst_15 [1] : vector<8x8xf32> to vector<8xf32>
    %25 = vector.shape_cast %24 : vector<8xf32> to vector<8x1xf32>
    %26 = vector.broadcast %25 : vector<8x1xf32> to vector<8x8xf32>
    %27 = arith.subf %23, %26 : vector<8x8xf32>
    %28 = math.exp %27 : vector<8x8xf32>
    %cst_16 = arith.constant dense<0.000000e+00> : vector<8xf32>
    %29 = vector.multi_reduction <add>, %28, %cst_16 [1] : vector<8x8xf32> to vector<8xf32>
    %30 = vector.shape_cast %29 : vector<8xf32> to vector<8x1xf32>
    %31 = vector.broadcast %30 : vector<8x1xf32> to vector<8x8xf32>
    %32 = arith.divf %28, %31 : vector<8x8xf32>
    %33 = arith.truncf %32 : vector<8x8xf32> to vector<8x8xbf16>
    %34 = vector.extract_strided_slice %14 {offsets = [0, 0], sizes = [8, 8], strides = [1, 1]} : vector<8x32xbf16> to vector<8x8xbf16>
    %cst_17 = arith.constant dense<0.000000e+00> : vector<8x8xf32>
    %35 = tpu.matmul %33, %34, %cst_17 {dimension_numbers = #tpu.dot_dimension_numbers<[1], [0], [0], [1], [0, 0, 1, 1], [], []>} : vector<8x8xbf16>, vector<8x8xbf16>, vector<8x8xf32> -> vector<8x8xf32>
    %c0_18 = arith.constant 0 : index
    %c0_19 = arith.constant 0 : index
    %c0_20 = arith.constant 0 : index
    %c0_21 = arith.constant 0 : index
    %c0_22 = arith.constant 0 : index
    %36 = vector.load %arg7[%c0_18, %c0_19, %c0_20, %c0_21, %c0_22] : memref<1x1x4x8x8xf32, #tpu.memory_space<vmem>>, vector<1x1x1x8x8xf32>
    %37 = vector.shape_cast %36 : vector<1x1x1x8x8xf32> to vector<8x8xf32>
    %38 = vector.shape_cast %32 : vector<8x8xf32> to vector<1x1x1x8x8xf32>
    tpu.vector_store %arg7[%c0_18, %c0_19, %c0_20, %c0_21, %c0_22], %38 {strides = array<i32>} : memref<1x1x4x8x8xf32, #tpu.memory_space<vmem>>, vector<1x1x1x8x8xf32>,
    %39 = vector.extract_strided_slice %10 {offsets = [0, 8], sizes = [8, 8], strides = [1, 1]} : vector<8x32xbf16> to vector<8x8xbf16>
    %40 = vector.extract_strided_slice %12 {offsets = [0, 8], sizes = [8, 8], strides = [1, 1]} : vector<8x32xbf16> to vector<8x8xbf16>
    %cst_23 = arith.constant dense<0.000000e+00> : vector<8x8xf32>
    %41 = tpu.matmul %39, %40, %cst_23 {dimension_numbers = #tpu.dot_dimension_numbers<[1], [1], [0], [0], [0, 0, 1, 0], [], []>} : vector<8x8xbf16>, vector<8x8xbf16>, vector<8x8xf32> -> vector<8x8xf32>
    %cst_24 = arith.constant -1.000000e+09 : f32
    %42 = vector.broadcast %cst_24 : f32 to vector<8x8xf32>
    %43 = arith.select %18, %42, %41 : vector<8x8xi1>, vector<8x8xf32>
    %cst_25 = arith.constant dense<0xFF800000> : vector<8xf32>
    %44 = vector.multi_reduction <maximumf>, %43, %cst_25 [1] : vector<8x8xf32> to vector<8xf32>
    %45 = vector.shape_cast %44 : vector<8xf32> to vector<8x1xf32>
    %46 = vector.broadcast %45 : vector<8x1xf32> to vector<8x8xf32>
    %47 = arith.subf %43, %46 : vector<8x8xf32>
    %48 = math.exp %47 : vector<8x8xf32>
    %cst_26 = arith.constant dense<0.000000e+00> : vector<8xf32>
    %49 = vector.multi_reduction <add>, %48, %cst_26 [1] : vector<8x8xf32> to vector<8xf32>
    %50 = vector.shape_cast %49 : vector<8xf32> to vector<8x1xf32>
    %51 = vector.broadcast %50 : vector<8x1xf32> to vector<8x8xf32>
    %52 = arith.divf %48, %51 : vector<8x8xf32>
    %53 = arith.truncf %52 : vector<8x8xf32> to vector<8x8xbf16>
    %54 = vector.extract_strided_slice %14 {offsets = [0, 8], sizes = [8, 8], strides = [1, 1]} : vector<8x32xbf16> to vector<8x8xbf16>
    %cst_27 = arith.constant dense<0.000000e+00> : vector<8x8xf32>
    %55 = tpu.matmul %53, %54, %cst_27 {dimension_numbers = #tpu.dot_dimension_numbers<[1], [0], [0], [1], [0, 0, 1, 1], [], []>} : vector<8x8xbf16>, vector<8x8xbf16>, vector<8x8xf32> -> vector<8x8xf32>
    %c0_28 = arith.constant 0 : index
    %c0_29 = arith.constant 0 : index
    %c1 = arith.constant 1 : index
    %c0_30 = arith.constant 0 : index
    %c0_31 = arith.constant 0 : index
    %56 = vector.load %arg7[%c0_28, %c0_29, %c1, %c0_30, %c0_31] : memref<1x1x4x8x8xf32, #tpu.memory_space<vmem>>, vector<1x1x1x8x8xf32>
    %57 = vector.shape_cast %56 : vector<1x1x1x8x8xf32> to vector<8x8xf32>
    %58 = vector.shape_cast %52 : vector<8x8xf32> to vector<1x1x1x8x8xf32>
    tpu.vector_store %arg7[%c0_28, %c0_29, %c1, %c0_30, %c0_31], %58 {strides = array<i32>} : memref<1x1x4x8x8xf32, #tpu.memory_space<vmem>>, vector<1x1x1x8x8xf32>,
    %59 = vector.extract_strided_slice %10 {offsets = [0, 16], sizes = [8, 8], strides = [1, 1]} : vector<8x32xbf16> to vector<8x8xbf16>
    %60 = vector.extract_strided_slice %12 {offsets = [0, 16], sizes = [8, 8], strides = [1, 1]} : vector<8x32xbf16> to vector<8x8xbf16>
    %cst_32 = arith.constant dense<0.000000e+00> : vector<8x8xf32>
    %61 = tpu.matmul %59, %60, %cst_32 {dimension_numbers = #tpu.dot_dimension_numbers<[1], [1], [0], [0], [0, 0, 1, 0], [], []>} : vector<8x8xbf16>, vector<8x8xbf16>, vector<8x8xf32> -> vector<8x8xf32>
    %cst_33 = arith.constant -1.000000e+09 : f32
    %62 = vector.broadcast %cst_33 : f32 to vector<8x8xf32>
    %63 = arith.select %18, %62, %61 : vector<8x8xi1>, vector<8x8xf32>
    %cst_34 = arith.constant dense<0xFF800000> : vector<8xf32>
    %64 = vector.multi_reduction <maximumf>, %63, %cst_34 [1] : vector<8x8xf32> to vector<8xf32>
    %65 = vector.shape_cast %64 : vector<8xf32> to vector<8x1xf32>
    %66 = vector.broadcast %65 : vector<8x1xf32> to vector<8x8xf32>
    %67 = arith.subf %63, %66 : vector<8x8xf32>
    %68 = math.exp %67 : vector<8x8xf32>
    %cst_35 = arith.constant dense<0.000000e+00> : vector<8xf32>
    %69 = vector.multi_reduction <add>, %68, %cst_35 [1] : vector<8x8xf32> to vector<8xf32>
    %70 = vector.shape_cast %69 : vector<8xf32> to vector<8x1xf32>
    %71 = vector.broadcast %70 : vector<8x1xf32> to vector<8x8xf32>
    %72 = arith.divf %68, %71 : vector<8x8xf32>
    %73 = arith.truncf %72 : vector<8x8xf32> to vector<8x8xbf16>
    %74 = vector.extract_strided_slice %14 {offsets = [0, 16], sizes = [8, 8], strides = [1, 1]} : vector<8x32xbf16> to vector<8x8xbf16>
    %cst_36 = arith.constant dense<0.000000e+00> : vector<8x8xf32>
    %75 = tpu.matmul %73, %74, %cst_36 {dimension_numbers = #tpu.dot_dimension_numbers<[1], [0], [0], [1], [0, 0, 1, 1], [], []>} : vector<8x8xbf16>, vector<8x8xbf16>, vector<8x8xf32> -> vector<8x8xf32>
    %c0_37 = arith.constant 0 : index
    %c0_38 = arith.constant 0 : index
    %c2 = arith.constant 2 : index
    %c0_39 = arith.constant 0 : index
    %c0_40 = arith.constant 0 : index
    %76 = vector.load %arg7[%c0_37, %c0_38, %c2, %c0_39, %c0_40] : memref<1x1x4x8x8xf32, #tpu.memory_space<vmem>>, vector<1x1x1x8x8xf32>
    %77 = vector.shape_cast %76 : vector<1x1x1x8x8xf32> to vector<8x8xf32>
    %78 = vector.shape_cast %72 : vector<8x8xf32> to vector<1x1x1x8x8xf32>
    tpu.vector_store %arg7[%c0_37, %c0_38, %c2, %c0_39, %c0_40], %78 {strides = array<i32>} : memref<1x1x4x8x8xf32, #tpu.memory_space<vmem>>, vector<1x1x1x8x8xf32>,
    %79 = vector.extract_strided_slice %10 {offsets = [0, 24], sizes = [8, 8], strides = [1, 1]} : vector<8x32xbf16> to vector<8x8xbf16>
    %80 = vector.extract_strided_slice %12 {offsets = [0, 24], sizes = [8, 8], strides = [1, 1]} : vector<8x32xbf16> to vector<8x8xbf16>
    %cst_41 = arith.constant dense<0.000000e+00> : vector<8x8xf32>
    %81 = tpu.matmul %79, %80, %cst_41 {dimension_numbers = #tpu.dot_dimension_numbers<[1], [1], [0], [0], [0, 0, 1, 0], [], []>} : vector<8x8xbf16>, vector<8x8xbf16>, vector<8x8xf32> -> vector<8x8xf32>
    %cst_42 = arith.constant -1.000000e+09 : f32
    %82 = vector.broadcast %cst_42 : f32 to vector<8x8xf32>
    %83 = arith.select %18, %82, %81 : vector<8x8xi1>, vector<8x8xf32>
    %cst_43 = arith.constant dense<0xFF800000> : vector<8xf32>
    %84 = vector.multi_reduction <maximumf>, %83, %cst_43 [1] : vector<8x8xf32> to vector<8xf32>
    %85 = vector.shape_cast %84 : vector<8xf32> to vector<8x1xf32>
    %86 = vector.broadcast %85 : vector<8x1xf32> to vector<8x8xf32>
    %87 = arith.subf %83, %86 : vector<8x8xf32>
    %88 = math.exp %87 : vector<8x8xf32>
    %cst_44 = arith.constant dense<0.000000e+00> : vector<8xf32>
    %89 = vector.multi_reduction <add>, %88, %cst_44 [1] : vector<8x8xf32> to vector<8xf32>
    %90 = vector.shape_cast %89 : vector<8xf32> to vector<8x1xf32>
    %91 = vector.broadcast %90 : vector<8x1xf32> to vector<8x8xf32>
    %92 = arith.divf %88, %91 : vector<8x8xf32>
    %93 = arith.truncf %92 : vector<8x8xf32> to vector<8x8xbf16>
    %94 = vector.extract_strided_slice %14 {offsets = [0, 24], sizes = [8, 8], strides = [1, 1]} : vector<8x32xbf16> to vector<8x8xbf16>
    %cst_45 = arith.constant dense<0.000000e+00> : vector<8x8xf32>
    %95 = tpu.matmul %93, %94, %cst_45 {dimension_numbers = #tpu.dot_dimension_numbers<[1], [0], [0], [1], [0, 0, 1, 1], [], []>} : vector<8x8xbf16>, vector<8x8xbf16>, vector<8x8xf32> -> vector<8x8xf32>
    %c0_46 = arith.constant 0 : index
    %c0_47 = arith.constant 0 : index
    %c3 = arith.constant 3 : index
    %c0_48 = arith.constant 0 : index
    %c0_49 = arith.constant 0 : index
    %96 = vector.load %arg7[%c0_46, %c0_47, %c3, %c0_48, %c0_49] : memref<1x1x4x8x8xf32, #tpu.memory_space<vmem>>, vector<1x1x1x8x8xf32>
    %97 = vector.shape_cast %96 : vector<1x1x1x8x8xf32> to vector<8x8xf32>
    %98 = vector.shape_cast %92 : vector<8x8xf32> to vector<1x1x1x8x8xf32>
    tpu.vector_store %arg7[%c0_46, %c0_47, %c3, %c0_48, %c0_49], %98 {strides = array<i32>} : memref<1x1x4x8x8xf32, #tpu.memory_space<vmem>>, vector<1x1x1x8x8xf32>,
    %99 = tpu.concatenate %35, %55, %75, %95 in 1 : vector<8x8xf32>, vector<8x8xf32>, vector<8x8xf32>, vector<8x8xf32> -> vector<8x32xf32>
    %100 = arith.truncf %99 : vector<8x32xf32> to vector<8x32xbf16>
    %c0_50 = arith.constant 0 : index
    %c0_51 = arith.constant 0 : index
    %c0_52 = arith.constant 0 : index
    %c0_53 = arith.constant 0 : index
    %101 = vector.load %arg6[%c0_50, %c0_51, %c0_52, %c0_53] : memref<1x1x8x32xbf16, #tpu.memory_space<vmem>>, vector<1x1x8x32xbf16>
    %102 = vector.shape_cast %101 : vector<1x1x8x32xbf16> to vector<8x32xbf16>
    %103 = vector.shape_cast %100 : vector<8x32xbf16> to vector<1x1x8x32xbf16>
    tpu.vector_store %arg6[%c0_50, %c0_51, %c0_52, %c0_53], %103 {strides = array<i32>} : memref<1x1x8x32xbf16, #tpu.memory_space<vmem>>, vector<1x1x8x32xbf16>,
    return
  }
  func.func @transform_0(%arg0: i32, %arg1: i32) -> (i32, i32, i32) {
    %c0_i32 = arith.constant 0 : i32
    %c0_i32_0 = arith.constant 0 : i32
    %c0_i32_1 = arith.constant 0 : i32
    return %arg1, %c0_i32, %c0_i32_0 : i32, i32, i32
  }
  func.func @transform_1(%arg0: i32, %arg1: i32) -> (i32, i32, i32) {
    %c0_i32 = arith.constant 0 : i32
    %c0_i32_0 = arith.constant 0 : i32
    %c0_i32_1 = arith.constant 0 : i32
    return %arg0, %c0_i32, %c0_i32_0 : i32, i32, i32
  }
  func.func @transform_2(%arg0: i32, %arg1: i32) -> (i32, i32, i32) {
    %c0_i32 = arith.constant 0 : i32
    %c0_i32_0 = arith.constant 0 : i32
    %c0_i32_1 = arith.constant 0 : i32
    return %arg0, %c0_i32, %c0_i32_0 : i32, i32, i32
  }
  func.func @transform_3(%arg0: i32, %arg1: i32) -> (i32, i32, i32, i32) {
    %c0_i32 = arith.constant 0 : i32
    %c0_i32_0 = arith.constant 0 : i32
    %c0_i32_1 = arith.constant 0 : i32
    return %arg0, %arg1, %c0_i32, %c0_i32_0 : i32, i32, i32, i32
  }
  func.func @transform_4(%arg0: i32, %arg1: i32) -> (i32, i32, i32, i32) {
    %c0_i32 = arith.constant 0 : i32
    %c0_i32_0 = arith.constant 0 : i32
    %c0_i32_1 = arith.constant 0 : i32
    return %arg0, %arg1, %c0_i32, %c0_i32_0 : i32, i32, i32, i32
  }
  func.func @transform_5(%arg0: i32, %arg1: i32) -> (i32, i32, i32, i32, i32) {
    %c0_i32 = arith.constant 0 : i32
    %c0_i32_0 = arith.constant 0 : i32
    %c0_i32_1 = arith.constant 0 : i32
    %c0_i32_2 = arith.constant 0 : i32
    return %arg0, %arg1, %c0_i32, %c0_i32_0, %c0_i32_1 : i32, i32, i32, i32, i32
  }
}

</mosaic_0001>

<llo_original>
// kernel: com_attention_forward.5
$region0: #{com_attention_forward.5}
  #allocation0 [shape = 'u32[]', space=smem, size = 0x4, offset = 0x4, fixed_abs, tag = 'smem constant byte address 0x4 - core index']
  #allocation1 [shape = 'u32[144,128]{1,0:T(1,128)}', space=vmem, size = 0x12000, scoped, tag = 'internal scratch']
  %s0 = inlined_call_operand.vmem [shape: bf16[2,16,32], index: 0, kind: input, shape index: {}]
  %s1 = inlined_call_operand.vmem [shape: bf16[2,32,64], index: 1, kind: input, shape index: {}]
  %s2 = inlined_call_operand.vmem [shape: f32[2,1,64], index: 2, kind: input, shape index: {}]
  %s3 = inlined_call_operand.hbm [shape: f32[16,32], index: 3, kind: output, shape index: {}]
  %s4 = sld [smem:[#allocation0]]
  $region22: #{com_attention_forward.5} parent=0
    _
  %s6 = ssub.s32 1, %s4
  %s7 = scalar_select 0, %s6, %s4
  $region1: #{com_attention_forward.5} parent=0
    #allocation2 [shape = 'u8[8192]{0}', space=vmem, size = 0x2000, scoped, tag = 'output window, operand 0, single buffered']
    #allocation3 [shape = 's32[1]{0}', space=sflag, size = 0x4, scoped, tag = 'scoped memory for com_attention_forward.5']
    %8 = vsyncpa [#allocation3], 0
    // Predicated region
    $region2: #{com_attention_forward.5} parent=1 // pred_check
      _
    $region3: #{com_attention_forward.5} parent=1 // pred_check_branch
      %10 = sbr.rel (0) target = $region5
    $region4: #{com_attention_forward.5} parent=1 // pred_region
      _
    $region5: #{com_attention_forward.5} parent=1 // pred_fallthru
      _
    // Predicated region
    $region6: #{com_attention_forward.5} parent=1 // pred_check
      _
    $region7: #{com_attention_forward.5} parent=1 // pred_check_branch
      %12 = sbr.rel (0) target = $region9
    $region8: #{com_attention_forward.5} parent=1 // pred_region
      _
    $region9: #{com_attention_forward.5} parent=1 // pred_fallthru
      _
    // Predicated region
    $region10: #{com_attention_forward.5} parent=1 // pred_check
      _
    $region11: #{com_attention_forward.5} parent=1 // pred_check_branch
      %14 = sbr.rel (0) target = $region13
    $region12: #{com_attention_forward.5} parent=1 // pred_region
      _
    $region13: #{com_attention_forward.5} parent=1 // pred_fallthru
      _
    %v16 = vld [vmem:[%s0] sm:$0xf]
    %v17 = vld [vmem:[%s0 + $0x4] sm:$0xf]
    %v18 = vld [vmem:[%s1] sm:$0xf]
    %v19 = vld [vmem:[%s1 + $0x4] sm:$0xf]
    %v20 = vld [vmem:[%s1 + $0x8] sm:$0xf]
    %v21 = vld [vmem:[%s1 + $0xc] sm:$0xf]
    %v22 = vld [vmem:[%s2] sm:$0x1]
    %v24 = vlaneseq
    %v25 = vshrl.u32 %v24, 7
    %v26 = vsub.s32 0, %v25
    %v27 = vrot.slane %v22, %v26
    %v31 = vunpack.c.l.b16 %v16
    %v32 = vunpack.c.l.b16 %v17
    %v33 = vpack.c.b16 %v32, %v31
    %v38 = vunpack.c.l.b16 %v18
    %v39 = vunpack.c.l.b16 %v19
    %v40 = vunpack.c.l.b16 %v20
    %v41 = vunpack.c.l.b16 %v21
    %v42 = vpack.c.b16 %v39, %v38
    %v43 = vpack.c.b16 %v41, %v40
    %vm46 = vcmask 261120
    %v48 = vsel %vm46, %v33, 0
    %50 = vmatprep.subr.bf16.mxu0 0
    %51 = vmatpush1.bf16.msra.mxu0 %v42
    %52 = vmatprep.subr.bf16.mxu0 0
    %53 = vmatpush1.bf16.msra.mxu0 %v43
    %54 = vmatprep.subr.bf16.mxu0 0
    %55 = vmatpush1.bf16.msra.mxu0 0
    %56 = vmatprep.subr.bf16.mxu0 0
    %57 = vmatpush1.bf16.msra.mxu0 0
    %58 = vmatprep.subr.bf16.mxu0 0
    %59 = vmatpush1.bf16.msra.mxu0 0
    %60 = vmatprep.subr.bf16.mxu0 0
    %61 = vmatpush1.bf16.msra.mxu0 0
    %62 = vmatprep.subr.bf16.mxu0 0
    %63 = vmatpush1.bf16.msra.mxu0 0
    %64 = vmatprep.subr.bf16.mxu0 0
    %65 = vmatpush1.bf16.msra.mxu0 0
    %66 = vmatprep.subr.bf16.mxu0 0
    %67 = vmatpush1.bf16.msra.mxu0 0
    %68 = vmatprep.subr.bf16.mxu0 0
    %69 = vmatpush1.bf16.msra.mxu0 0
    %70 = vmatprep.subr.bf16.mxu0 0
    %71 = vmatpush1.bf16.msra.mxu0 0
    %72 = vmatprep.subr.bf16.mxu0 0
    %73 = vmatpush1.bf16.msra.mxu0 0
    %74 = vmatprep.subr.bf16.mxu0 0
    %75 = vmatpush1.bf16.msra.mxu0 0
    %76 = vmatprep.subr.bf16.mxu0 0
    %77 = vmatpush1.bf16.msra.mxu0 0
    %78 = vmatprep.subr.bf16.mxu0 0
    %79 = vmatpush1.bf16.msra.mxu0 0
    %80 = vmatprep.subr.bf16.mxu0 0
    %81 = vmatpush1.bf16.msra.mxu0 0
    %82 = vmatprep.mubr.bf16.mxu0 0
    %83 = vmatmul.mubr.bf16.gmra.mrb[0].mxu0 %v48
    %v84 = vpop.f32.mrb[0].mxu0
    %v85 = vadd.f32 %v27, %v84
    %v86 = vpop.f32.mrb[0].mxu0
    %v87 = vpop.f32.mrb[0].mxu0
    %v88 = vadd.f32 %v27, %v87
    %v89 = vpop.f32.mrb[0].mxu0
    %90 = vdwg.mxu0
    %s91 = scalar_lea.vmem %s0, 8
    %v92 = vld [vmem:[%s91] sm:$0xf]
    %v93 = vld [vmem:[%s91 + $0x4] sm:$0xf]
    %s94 = scalar_lea.vmem %s1, 16
    %v95 = vld [vmem:[%s94] sm:$0xf]
    %v96 = vld [vmem:[%s94 + $0x4] sm:$0xf]
    %v97 = vld [vmem:[%s94 + $0x8] sm:$0xf]
    %v98 = vld [vmem:[%s94 + $0xc] sm:$0xf]
    %s99 = scalar_lea.vmem %s2, 1
    %v100 = vld [vmem:[%s99] sm:$0x1]
    %v102 = vlaneseq
    %v103 = vshrl.u32 %v102, 7
    %v104 = vsub.s32 0, %v103
    %v105 = vrot.slane %v100, %v104
    %v109 = vunpack.c.l.b16 %v92
    %v110 = vunpack.c.l.b16 %v93
    %v111 = vpack.c.b16 %v110, %v109
    %v116 = vunpack.c.l.b16 %v95
    %v117 = vunpack.c.l.b16 %v96
    %v118 = vunpack.c.l.b16 %v97
    %v119 = vunpack.c.l.b16 %v98
    %v120 = vpack.c.b16 %v117, %v116
    %v121 = vpack.c.b16 %v119, %v118
    %v125 = vsel %vm46, %v111, 0
    %127 = vmatprep.subr.bf16.mxu0 0
    %128 = vmatpush1.bf16.msra.mxu0 %v120
    %129 = vmatprep.subr.bf16.mxu0 0
    %130 = vmatpush1.bf16.msra.mxu0 %v121
    %131 = vmatprep.subr.bf16.mxu0 0
    %132 = vmatpush1.bf16.msra.mxu0 0
    %133 = vmatprep.subr.bf16.mxu0 0
    %134 = vmatpush1.bf16.msra.mxu0 0
    %135 = vmatprep.subr.bf16.mxu0 0
    %136 = vmatpush1.bf16.msra.mxu0 0
    %137 = vmatprep.subr.bf16.mxu0 0
    %138 = vmatpush1.bf16.msra.mxu0 0
    %139 = vmatprep.subr.bf16.mxu0 0
    %140 = vmatpush1.bf16.msra.mxu0 0
    %141 = vmatprep.subr.bf16.mxu0 0
    %142 = vmatpush1.bf16.msra.mxu0 0
    %143 = vmatprep.subr.bf16.mxu0 0
    %144 = vmatpush1.bf16.msra.mxu0 0
    %145 = vmatprep.subr.bf16.mxu0 0
    %146 = vmatpush1.bf16.msra.mxu0 0
    %147 = vmatprep.subr.bf16.mxu0 0
    %148 = vmatpush1.bf16.msra.mxu0 0
    %149 = vmatprep.subr.bf16.mxu0 0
    %150 = vmatpush1.bf16.msra.mxu0 0
    %151 = vmatprep.subr.bf16.mxu0 0
    %152 = vmatpush1.bf16.msra.mxu0 0
    %153 = vmatprep.subr.bf16.mxu0 0
    %154 = vmatpush1.bf16.msra.mxu0 0
    %155 = vmatprep.subr.bf16.mxu0 0
    %156 = vmatpush1.bf16.msra.mxu0 0
    %157 = vmatprep.subr.bf16.mxu0 0
    %158 = vmatpush1.bf16.msra.mxu0 0
    %159 = vmatprep.mubr.bf16.mxu0 0
    %160 = vmatmul.mubr.bf16.gmra.mrb[0].mxu0 %v125
    %v161 = vpop.f32.mrb[0].mxu0
    %v162 = vadd.f32 %v105, %v161
    %v163 = vpop.f32.mrb[0].mxu0
    %v164 = vpop.f32.mrb[0].mxu0
    %v165 = vadd.f32 %v105, %v164
    %v166 = vpop.f32.mrb[0].mxu0
    %167 = vdwg.mxu0
    %v168 = vmax.f32 %v85, %v162
    %v169 = vmax.f32 %v88, %v165
    %v170 = vsub.f32 %v85, %v168
    %v171 = vsub.f32 %v88, %v169
    %v172 = vmul.f32 %v170, 1.442695
    %v173 = vpow.pop %v172
    %v174 = vmul.f32 %v171, 1.442695
    %v175 = vpow.pop %v174
    %v176 = vsub.f32 %v162, %v168
    %v177 = vsub.f32 %v165, %v169
    %v178 = vmul.f32 %v176, 1.442695
    %v179 = vpow.pop %v178
    %v180 = vmul.f32 %v177, 1.442695
    %v181 = vpow.pop %v180
    %184 = vrot.lane.b32.xlu0 %v173, 96
    %v185 = vpop.permute.xlu0 %184
    %186 = vrot.lane.b32.xlu0 %v175, 96
    %v187 = vpop.permute.xlu0 %186
    %v190 = vmul.f32 %v85, %v185
    %v191 = vmul.f32 %v88, %v187
    %194 = vrot.lane.b32.xlu0 %v179, 96
    %v195 = vpop.permute.xlu0 %194
    %196 = vrot.lane.b32.xlu0 %v181, 96
    %v197 = vpop.permute.xlu0 %196
    %v200 = vmul.f32 %v162, %v195
    %v201 = vmul.f32 %v165, %v197
    %v202 = vadd.f32 %v190, %v200
    %v203 = vadd.f32 %v191, %v201
    %v204 = vadd.f32 %v173, %v179
    %v205 = vadd.f32 %v175, %v181
    %v206 = vrcp.pop %v204
    %v207 = vrcp.pop %v205
    %210 = vrot.lane.b32.xlu0 %v206, 96
    %v211 = vpop.permute.xlu0 %210
    %212 = vrot.lane.b32.xlu0 %v207, 96
    %v213 = vpop.permute.xlu0 %212
    %v216 = vmul.f32 %v202, %v211
    %v217 = vmul.f32 %v203, %v213
    %218 = vst.msk [vmem:[#allocation2] sm:$0xff] %vm46, %v216
    %219 = vst.msk [vmem:[#allocation2 + $0x8] sm:$0xff] %vm46, %v217
    // Predicated region
    $region14: #{com_attention_forward.5} parent=1 // pred_check
      _
    $region15: #{com_attention_forward.5} parent=1 // pred_check_branch
      %221 = sbr.rel (0) target = $region17
    $region16: #{com_attention_forward.5} parent=1 // pred_region
      %s223 = ssub.s32 256, 256
      %224 = vsyncadd [#allocation3], %s223
      %s225 = sshll.u32 [#allocation2], 4
      %s226 = int_to_ptr.vmem [resolvable:$true] %s225
      %231 = dma.vmem_to_hbm [thread:$0]  %s226, 256, %s3, [#allocation3], 128, 128, 8
    $region17: #{com_attention_forward.5} parent=1 // pred_fallthru
      _
    // Predicated region
    $region18: #{com_attention_forward.5} parent=1 // pred_check
      _
    $region19: #{com_attention_forward.5} parent=1 // pred_check_branch
      %233 = sbr.rel (0) target = $region21
    $region20: #{com_attention_forward.5} parent=1 // pred_region
      %234 = dma.done [#allocation3], 256
    $region21: #{com_attention_forward.5} parent=1 // pred_fallthru
      _
    %235 = vsyncpa [#allocation3], 1

// kernel: com_attention_forward.3
$region0: #{com_attention_forward.3}
  #allocation0 [shape = 'u32[]', space=smem, size = 0x4, offset = 0x4, fixed_abs, tag = 'smem constant byte address 0x4 - core index']
  #allocation1 [shape = 'u32[144,128]{1,0:T(1,128)}', space=vmem, size = 0x12000, scoped, tag = 'internal scratch']
  #allocation2 [shape = 'f32[1,1]{1,0:T(1,128)S(1)}', space=vmem, size = 0x200, scoped, tag = 'scoped memory for com_attention_forward.3']
  %s0 = inlined_call_operand.vmem [shape: f32[2,8,32], index: 0, kind: input, shape index: {}]
  %s1 = inlined_call_operand.vmem [shape: f32[32,64], index: 1, kind: input, shape index: {}]
  %s2 = inlined_call_operand.vmem [shape: f32[1,64], index: 2, kind: input, shape index: {}]
  %s3 = inlined_call_operand.vmem [shape: f32[1,32], index: 3, kind: input, shape index: {}]
  %s4 = inlined_call_operand.<no memory space> [shape: f32[1,1], index: 4, kind: input, shape index: {}]
  %s5 = inlined_call_operand.vmem [shape: f32[2,8,8], index: 5, kind: input, shape index: {}]
  %s6 = inlined_call_operand.vmem [shape: bf16[2,2,8,8], index: 6, kind: output, shape index: {}]
  %s7 = sld [smem:[#allocation0]]
  $region94: #{com_attention_forward.3} parent=0
    _
  %s9 = ssub.s32 1, %s7
  %s10 = scalar_select 0, %s9, %s7
  %v11 = vstv %s4
  %12 = vst [vmem:[#allocation2] sm:$0x1] %v11
  $region1: #{com_attention_forward.3} parent=0
    #allocation3 [shape = 'u8[8192]{0}', space=vmem, size = 0x2000, scoped, tag = 'output window, operand 0']
    loop: start=0, step=1, limit=4
    $region2: #{com_attention_forward.3} parent=1 // loop_pre_header
      _
    $region3: #{com_attention_forward.3} parent=1 // loop_header
      %s14 = sphi 0, %s18
      %p15 = scmp.ge.s32.totalorder %s14, 4
      %s24 = sphi 0, %s26
      %s27 = sphi 0, %s24
      %s28 = sphi 0, %s27
      %s44 = sphi 0, %s28
      %s48 = sphi 0, %s48
      %s50 = sphi 0, %s48
      %s51 = sphi 0, %s50
      %s65 = sphi 0, %s51
      %s69 = sphi 0, %s69
      %s71 = sphi 0, %s69
      %s72 = sphi 0, %s71
      %s86 = sphi 0, %s72
      %s90 = sphi 0, %s90
      %s92 = sphi 0, %s90
      %s93 = sphi 0, %s92
      %s107 = sphi 0, %s93
      %s111 = sphi 0, %s111
      %s113 = sphi 0, %s111
      %s114 = sphi 0, %s113
      %s128 = sphi 0, %s114
      %s134 = sphi 0, %s136
      %s137 = sphi 0, %s134
      %s138 = sphi 0, %s137
      %s154 = sphi 0, %s138
      %s160 = sphi 0, %s162
      %s163 = sphi 0, %s160
      %s164 = sphi 0, %s163
      %s180 = sphi 0, %s164
    $region4: #{com_attention_forward.3} parent=1 // loop_header_branch
      %17 = sbr.rel (%p15) target = $region8
    $region5: #{com_attention_forward.3} parent=1 // loop_body
      %s19 = ssub.s32 %s14, 1
      %s20 = ssub.s32 %s14, 2
      %s21 = sadd.s32 %s14, 1
      %s22 = ssub.s32 %s14, %s21
      %p23 = scmp.eq.s32.totalorder %s22, 0
      %s25 = sadd.s32 %s24, 1
      %s26 = scalar_select %p23, %s24, %s25
      %p29 = pneg %p23
      %p30 = scmp.eq.s32.totalorder %s14, 1
      %p31 = por %p29, %p30
      %p32 = scmp.ne.s32.totalorder %s24, %s27
      %p33 = scmp.eq.s32.totalorder %s14, 0
      %p34 = por %p32, %p33
      %p35 = scmp.ne.s32.totalorder %s24, %s27
      %p36 = scmp.eq.s32.totalorder %s19, 1
      %p37 = por %p35, %p36
      %p38 = scmp.ne.s32.totalorder %s27, %s28
      %p39 = scmp.eq.s32.totalorder %s19, 0
      %p40 = por %p38, %p39
      %p41 = scmp.ne.s32.totalorder %s27, %s28
      %p42 = scmp.eq.s32.totalorder %s20, 1
      %p43 = por %p41, %p42
      %p45 = scmp.ne.s32.totalorder %s28, %s44
      %p46 = scmp.eq.s32.totalorder %s20, 0
      %p47 = por %p45, %p46
      %s49 = sadd.s32 %s48, 1
      %p52 = scmp.eq.s32.totalorder %s14, 1
      %p53 = scmp.ne.s32.totalorder %s48, %s50
      %p54 = scmp.eq.s32.totalorder %s14, 0
      %p55 = por %p53, %p54
      %p56 = scmp.ne.s32.totalorder %s48, %s50
      %p57 = scmp.eq.s32.totalorder %s19, 1
      %p58 = por %p56, %p57
      %p59 = scmp.ne.s32.totalorder %s50, %s51
      %p60 = scmp.eq.s32.totalorder %s19, 0
      %p61 = por %p59, %p60
      %p62 = scmp.ne.s32.totalorder %s50, %s51
      %p63 = scmp.eq.s32.totalorder %s20, 1
      %p64 = por %p62, %p63
      %p66 = scmp.ne.s32.totalorder %s51, %s65
      %p67 = scmp.eq.s32.totalorder %s20, 0
      %p68 = por %p66, %p67
      %s70 = sadd.s32 %s69, 1
      %p73 = scmp.eq.s32.totalorder %s14, 1
      %p74 = scmp.ne.s32.totalorder %s69, %s71
      %p75 = scmp.eq.s32.totalorder %s14, 0
      %p76 = por %p74, %p75
      %p77 = scmp.ne.s32.totalorder %s69, %s71
      %p78 = scmp.eq.s32.totalorder %s19, 1
      %p79 = por %p77, %p78
      %p80 = scmp.ne.s32.totalorder %s71, %s72
      %p81 = scmp.eq.s32.totalorder %s19, 0
      %p82 = por %p80, %p81
      %p83 = scmp.ne.s32.totalorder %s71, %s72
      %p84 = scmp.eq.s32.totalorder %s20, 1
      %p85 = por %p83, %p84
      %p87 = scmp.ne.s32.totalorder %s72, %s86
      %p88 = scmp.eq.s32.totalorder %s20, 0
      %p89 = por %p87, %p88
      %s91 = sadd.s32 %s90, 1
      %p94 = scmp.eq.s32.totalorder %s14, 1
      %p95 = scmp.ne.s32.totalorder %s90, %s92
      %p96 = scmp.eq.s32.totalorder %s14, 0
      %p97 = por %p95, %p96
      %p98 = scmp.ne.s32.totalorder %s90, %s92
      %p99 = scmp.eq.s32.totalorder %s19, 1
      %p100 = por %p98, %p99
      %p101 = scmp.ne.s32.totalorder %s92, %s93
      %p102 = scmp.eq.s32.totalorder %s19, 0
      %p103 = por %p101, %p102
      %p104 = scmp.ne.s32.totalorder %s92, %s93
      %p105 = scmp.eq.s32.totalorder %s20, 1
      %p106 = por %p104, %p105
      %p108 = scmp.ne.s32.totalorder %s93, %s107
      %p109 = scmp.eq.s32.totalorder %s20, 0
      %p110 = por %p108, %p109
      %s112 = sadd.s32 %s111, 1
      %p115 = scmp.eq.s32.totalorder %s14, 1
      %p116 = scmp.ne.s32.totalorder %s111, %s113
      %p117 = scmp.eq.s32.totalorder %s14, 0
      %p118 = por %p116, %p117
      %p119 = scmp.ne.s32.totalorder %s111, %s113
      %p120 = scmp.eq.s32.totalorder %s19, 1
      %p121 = por %p119, %p120
      %p122 = scmp.ne.s32.totalorder %s113, %s114
      %p123 = scmp.eq.s32.totalorder %s19, 0
      %p124 = por %p122, %p123
      %p125 = scmp.ne.s32.totalorder %s113, %s114
      %p126 = scmp.eq.s32.totalorder %s20, 1
      %p127 = por %p125, %p126
      %p129 = scmp.ne.s32.totalorder %s114, %s128
      %p130 = scmp.eq.s32.totalorder %s20, 0
      %p131 = por %p129, %p130
      %s132 = ssub.s32 %s14, %s21
      %p133 = scmp.eq.s32.totalorder %s132, 0
      %s135 = sadd.s32 %s134, 1
      %s136 = scalar_select %p133, %s134, %s135
      %p139 = pneg %p133
      %p140 = scmp.eq.s32.totalorder %s14, 1
      %p141 = por %p139, %p140
      %p142 = scmp.ne.s32.totalorder %s134, %s137
      %p143 = scmp.eq.s32.totalorder %s14, 0
      %p144 = por %p142, %p143
      %p145 = scmp.ne.s32.totalorder %s134, %s137
      %p146 = scmp.eq.s32.totalorder %s19, 1
      %p147 = por %p145, %p146
      %p148 = scmp.ne.s32.totalorder %s137, %s138
      %p149 = scmp.eq.s32.totalorder %s19, 0
      %p150 = por %p148, %p149
      %p151 = scmp.ne.s32.totalorder %s137, %s138
      %p152 = scmp.eq.s32.totalorder %s20, 1
      %p153 = por %p151, %p152
      %p155 = scmp.ne.s32.totalorder %s138, %s154
      %p156 = scmp.eq.s32.totalorder %s20, 0
      %p157 = por %p155, %p156
      %s158 = ssub.s32 %s14, %s21
      %p159 = scmp.eq.s32.totalorder %s158, 0
      %s161 = sadd.s32 %s160, 1
      %s162 = scalar_select %p159, %s160, %s161
      %p165 = pneg %p159
      %p166 = scmp.eq.s32.totalorder %s14, 1
      %p167 = por %p165, %p166
      %p168 = scmp.ne.s32.totalorder %s160, %s163
      %p169 = scmp.eq.s32.totalorder %s14, 0
      %p170 = por %p168, %p169
      %p171 = scmp.ne.s32.totalorder %s160, %s163
      %p172 = scmp.eq.s32.totalorder %s19, 1
      %p173 = por %p171, %p172
      %p174 = scmp.ne.s32.totalorder %s163, %s164
      %p175 = scmp.eq.s32.totalorder %s19, 0
      %p176 = por %p174, %p175
      %p177 = scmp.ne.s32.totalorder %s163, %s164
      %p178 = scmp.eq.s32.totalorder %s20, 1
      %p179 = por %p177, %p178
      %p181 = scmp.ne.s32.totalorder %s164, %s180
      %p182 = scmp.eq.s32.totalorder %s20, 0
      %p183 = por %p181, %p182
      %p184 = scmp.le.s32.totalorder 1, %s14
      %p185 = scmp.lt.s32.totalorder %s14, 3
      %p186 = pnand %p184, %p185
      %p187 = pneg %p186
      // Predicated region
      $region9: #{com_attention_forward.3} parent=5 // pred_check
        _
      $region10: #{com_attention_forward.3} parent=5 // pred_check_branch
        %189 = sbr.rel (%p186) target = $region12
      $region11: #{com_attention_forward.3} parent=5 // pred_region
        %s190 = ssub.s32 %s14, 1
        // Predicated region
        $region13: #{com_attention_forward.3} parent=11 // pred_check
          %p191 = pneg %p61
        $region14: #{com_attention_forward.3} parent=11 // pred_check_branch
          %193 = sbr.rel (%p191) target = $region16
        $region15: #{com_attention_forward.3} parent=11 // pred_region
          _
        $region16: #{com_attention_forward.3} parent=11 // pred_fallthru
          _
        // Predicated region
        $region17: #{com_attention_forward.3} parent=11 // pred_check
          %p194 = pneg %p82
        $region18: #{com_attention_forward.3} parent=11 // pred_check_branch
          %196 = sbr.rel (%p194) target = $region20
        $region19: #{com_attention_forward.3} parent=11 // pred_region
          _
        $region20: #{com_attention_forward.3} parent=11 // pred_fallthru
          _
        // Predicated region
        $region21: #{com_attention_forward.3} parent=11 // pred_check
          %p197 = pneg %p103
        $region22: #{com_attention_forward.3} parent=11 // pred_check_branch
          %199 = sbr.rel (%p197) target = $region24
        $region23: #{com_attention_forward.3} parent=11 // pred_region
          _
        $region24: #{com_attention_forward.3} parent=11 // pred_fallthru
          _
        // Predicated region
        $region25: #{com_attention_forward.3} parent=11 // pred_check
          %p200 = pneg %p124
        $region26: #{com_attention_forward.3} parent=11 // pred_check_branch
          %202 = sbr.rel (%p200) target = $region28
        $region27: #{com_attention_forward.3} parent=11 // pred_region
          _
        $region28: #{com_attention_forward.3} parent=11 // pred_fallthru
          _
      $region12: #{com_attention_forward.3} parent=5 // pred_fallthru
        _
      %p203 = scmp.lt.s32.totalorder %s14, 2
      // Predicated region
      $region29: #{com_attention_forward.3} parent=5 // pred_check
        %p204 = pneg %p203
      $region30: #{com_attention_forward.3} parent=5 // pred_check_branch
        %206 = sbr.rel (%p204) target = $region32
      $region31: #{com_attention_forward.3} parent=5 // pred_region
        // Predicated region
        $region33: #{com_attention_forward.3} parent=31 // pred_check
          %p207 = pneg %p34
        $region34: #{com_attention_forward.3} parent=31 // pred_check_branch
          %209 = sbr.rel (%p207) target = $region36
        $region35: #{com_attention_forward.3} parent=31 // pred_region
          %p210 = scmp.lt.s32.totalorder %s14, 1
          %s211 = scalar_select %p210, %s14, 1
          %s212 = smul.addr %s211, 8
          %s213 = scalar_lea.vmem %s0, %s212
        $region36: #{com_attention_forward.3} parent=31 // pred_fallthru
          _
        // Predicated region
        $region37: #{com_attention_forward.3} parent=31 // pred_check
          %p214 = pneg %p144
        $region38: #{com_attention_forward.3} parent=31 // pred_check_branch
          %216 = sbr.rel (%p214) target = $region40
        $region39: #{com_attention_forward.3} parent=31 // pred_region
          %p217 = scmp.lt.s32.totalorder %s14, 1
          %s218 = scalar_select %p217, %s14, 1
          %s219 = smul.addr %s218, 8
          %s220 = scalar_lea.vmem %s5, %s219
        $region40: #{com_attention_forward.3} parent=31 // pred_fallthru
          _
      $region32: #{com_attention_forward.3} parent=5 // pred_fallthru
        _
      %p221 = scmp.le.s32.totalorder 1, %s14
      %p222 = scmp.lt.s32.totalorder %s14, 3
      %p223 = pnand %p221, %p222
      %p224 = pneg %p223
      // Predicated region
      $region41: #{com_attention_forward.3} parent=5 // pred_check
        _
      $region42: #{com_attention_forward.3} parent=5 // pred_check_branch
        %226 = sbr.rel (%p223) target = $region44
      $region43: #{com_attention_forward.3} parent=5 // pred_region
        %s227 = ssub.s32 %s14, 1
        %p228 = scmp.lt.s32.totalorder %s19, 1
        %s229 = scalar_select %p228, %s19, 1
        %s230 = smul.addr %s229, 8
        %s231 = scalar_lea.vmem %s0, %s230
        %p232 = pneg %p40
        %p233 = pneg %p37
        %p234 = pneg %p61
        %p235 = pneg %p58
        %p236 = pneg %p82
        %p237 = pneg %p79
        %p238 = pneg %p103
        %p239 = pneg %p100
        %p240 = pneg %p124
        %p241 = pneg %p121
        %p242 = scmp.lt.s32.totalorder %s19, 1
        %s243 = scalar_select %p242, %s19, 1
        %s244 = smul.addr %s243, 8
        %s245 = scalar_lea.vmem %s5, %s244
        %p246 = pneg %p150
        %p247 = pneg %p147
        %p248 = pneg %p176
        %p249 = pneg %p173
        %s250 = sand.u32 %s163, 1
        %s251 = sand.u32 %s163, 1
        %s252 = smul.addr %s251, 8
        %s253 = scalar_lea.vmem [#allocation3], %s252
        %p254 = scmp.lt.s32.totalorder %s19, 1
        %s255 = scalar_select %p254, %s19, 1
        %s256 = smul.addr %s255, 8
        %s257 = scalar_lea.vmem %s0, %s256
        %p258 = scmp.lt.s32.totalorder %s19, 1
        %s259 = scalar_select %p258, %s19, 1
        %s260 = smul.addr %s259, 8
        %s261 = scalar_lea.vmem %s5, %s260
        %v262 = vld [vmem:[%s257] sm:$0xff]
        %v263 = vld [vmem:[%s1] sm:$0xff]
        %v264 = vld [vmem:[%s1 + $0x8] sm:$0xff]
        %v265 = vld [vmem:[%s1 + $0x10] sm:$0xff]
        %v266 = vld [vmem:[%s1 + $0x18] sm:$0xff]
        %v267 = vld [vmem:[%s2] sm:$0x1]
        %v269 = vlaneseq
        %v270 = vshrl.u32 %v269, 7
        %v271 = vsub.s32 0, %v270
        %v272 = vrot.slane %v267, %v271
        %vm274 = vcmask 261120
        %v276 = vsel %vm274, %v262, 0
        %278 = vmatprep.subr.mxu0 0.0
        %279 = vmatpush1.msra.mxu0 %v263
        %280 = vmatprep.subr.mxu0 0.0
        %281 = vmatpush1.msra.mxu0 %v264
        %282 = vmatprep.subr.mxu0 0.0
        %283 = vmatpush1.msra.mxu0 %v265
        %284 = vmatprep.subr.mxu0 0.0
        %285 = vmatpush1.msra.mxu0 %v266
        %286 = vmatprep.subr.mxu0 0.0
        %287 = vmatpush1.msra.mxu0 0.0
        %288 = vmatprep.subr.mxu0 0.0
        %289 = vmatpush1.msra.mxu0 0.0
        %290 = vmatprep.subr.mxu0 0.0
        %291 = vmatpush1.msra.mxu0 0.0
        %292 = vmatprep.subr.mxu0 0.0
        %293 = vmatpush1.msra.mxu0 0.0
        %294 = vmatprep.subr.mxu0 0.0
        %295 = vmatpush1.msra.mxu0 0.0
        %296 = vmatprep.subr.mxu0 0.0
        %297 = vmatpush1.msra.mxu0 0.0
        %298 = vmatprep.subr.mxu0 0.0
        %299 = vmatpush1.msra.mxu0 0.0
        %300 = vmatprep.subr.mxu0 0.0
        %301 = vmatpush1.msra.mxu0 0.0
        %302 = vmatprep.subr.mxu0 0.0
        %303 = vmatpush1.msra.mxu0 0.0
        %304 = vmatprep.subr.mxu0 0.0
        %305 = vmatpush1.msra.mxu0 0.0
        %306 = vmatprep.subr.mxu0 0.0
        %307 = vmatpush1.msra.mxu0 0.0
        %308 = vmatprep.subr.mxu0 0.0
        %309 = vmatpush1.msra.mxu0 0.0
        %310 = vmatprep.subr.mxu0 0.0
        %311 = vmatpush1.msra.mxu0 0.0
        %312 = vmatprep.subr.mxu0 0.0
        %313 = vmatpush1.msra.mxu0 0.0
        %314 = vmatprep.subr.mxu0 0.0
        %315 = vmatpush1.msra.mxu0 0.0
        %316 = vmatprep.subr.mxu0 0.0
        %317 = vmatpush1.msra.mxu0 0.0
        %318 = vmatprep.subr.mxu0 0.0
        %319 = vmatpush1.msra.mxu0 0.0
        %320 = vmatprep.subr.mxu0 0.0
        %321 = vmatpush1.msra.mxu0 0.0
        %322 = vmatprep.subr.mxu0 0.0
        %323 = vmatpush1.msra.mxu0 0.0
        %324 = vmatprep.subr.mxu0 0.0
        %325 = vmatpush1.msra.mxu0 0.0
        %326 = vmatprep.subr.mxu0 0.0
        %327 = vmatpush1.msra.mxu0 0.0
        %328 = vmatprep.subr.mxu0 0.0
        %329 = vmatpush1.msra.mxu0 0.0
        %330 = vmatprep.subr.mxu0 0.0
        %331 = vmatpush1.msra.mxu0 0.0
        %332 = vmatprep.subr.mxu0 0.0
        %333 = vmatpush1.msra.mxu0 0.0
        %334 = vmatprep.subr.mxu0 0.0
        %335 = vmatpush1.msra.mxu0 0.0
        %336 = vmatprep.subr.mxu0 0.0
        %337 = vmatpush1.msra.mxu0 0.0
        %338 = vmatprep.subr.mxu0 0.0
        %339 = vmatpush1.msra.mxu0 0.0
        %340 = vmatprep.subr.mxu0 0.0
        %341 = vmatpush1.msra.mxu0 0.0
        %342 = vmatprep.mubr.f32.mxu0 0.0
        %343 = vmatmul.mubr.f32.gmra.mrb[0].mxu0 %v276
        %v344 = vpop.f32.mrb[0].mxu0
        %v345 = vadd.f32 %v272, %v344
        %v346 = vpop.f32.mrb[0].mxu0
        %347 = vdwg.mxu0
        %v348 = vld [vmem:[%s3] sm:$0x1]
        %v350 = vlaneseq
        %v351 = vshrl.u32 %v350, 7
        %v352 = vsub.s32 0, %v351
        %v353 = vrot.slane %v348, %v352
        %v355 = vmul.f32 %v345, %v353
        %v356 = vld [vmem:[#allocation2] sm:$0x1]
        %v358 = vlaneseq
        %v359 = vshrl.u32 %v358, 7
        %v360 = vsub.s32 0, %v359
        %v361 = vrot.slane %v356, %v360
        %362 = vset.pattern.permute.xlu0 0
        %363 = vperm.xlu0 %362, %v361
        %v364 = vpop.permute.xlu0 %363
        %367 = vrot.lane.b32.xlu0 %v345, 96
        %v368 = vpop.permute.xlu0 %367
        %v370 = vsel %vm274, %v355, 0
        %v372 = vsel %vm274, %v368, 0
        %374 = vmatprep.subr.mxu0 0.0
        %375 = vmatpush1.xpose.msra.mxu0 %v372
        %376 = vmatprep.subr.mxu0 0.0
        %377 = vmatpush1.xpose.msra.mxu0 0.0
        %378 = vmatprep.subr.mxu0 0.0
        %379 = vmatpush1.xpose.msra.mxu0 0.0
        %380 = vmatprep.subr.mxu0 0.0
        %381 = vmatpush1.xpose.msra.mxu0 0.0
        %382 = vmatprep.subr.mxu0 0.0
        %383 = vmatpush1.xpose.msra.mxu0 0.0
        %384 = vmatprep.subr.mxu0 0.0
        %385 = vmatpush1.xpose.msra.mxu0 0.0
        %386 = vmatprep.subr.mxu0 0.0
        %387 = vmatpush1.xpose.msra.mxu0 0.0
        %388 = vmatprep.subr.mxu0 0.0
        %389 = vmatpush1.xpose.msra.mxu0 0.0
        %390 = vmatprep.subr.mxu0 0.0
        %391 = vmatpush1.xpose.msra.mxu0 0.0
        %392 = vmatprep.subr.mxu0 0.0
        %393 = vmatpush1.xpose.msra.mxu0 0.0
        %394 = vmatprep.subr.mxu0 0.0
        %395 = vmatpush1.xpose.msra.mxu0 0.0
        %396 = vmatprep.subr.mxu0 0.0
        %397 = vmatpush1.xpose.msra.mxu0 0.0
        %398 = vmatprep.subr.mxu0 0.0
        %399 = vmatpush1.xpose.msra.mxu0 0.0
        %400 = vmatprep.subr.mxu0 0.0
        %401 = vmatpush1.xpose.msra.mxu0 0.0
        %402 = vmatprep.subr.mxu0 0.0
        %403 = vmatpush1.xpose.msra.mxu0 0.0
        %404 = vmatprep.subr.mxu0 0.0
        %405 = vmatpush1.xpose.msra.mxu0 0.0
        %406 = vmatprep.subr.mxu0 0.0
        %407 = vmatpush1.xpose.msra.mxu0 0.0
        %408 = vmatprep.subr.mxu0 0.0
        %409 = vmatpush1.xpose.msra.mxu0 0.0
        %410 = vmatprep.subr.mxu0 0.0
        %411 = vmatpush1.xpose.msra.mxu0 0.0
        %412 = vmatprep.subr.mxu0 0.0
        %413 = vmatpush1.xpose.msra.mxu0 0.0
        %414 = vmatprep.subr.mxu0 0.0
        %415 = vmatpush1.xpose.msra.mxu0 0.0
        %416 = vmatprep.subr.mxu0 0.0
        %417 = vmatpush1.xpose.msra.mxu0 0.0
        %418 = vmatprep.subr.mxu0 0.0
        %419 = vmatpush1.xpose.msra.mxu0 0.0
        %420 = vmatprep.subr.mxu0 0.0
        %421 = vmatpush1.xpose.msra.mxu0 0.0
        %422 = vmatprep.subr.mxu0 0.0
        %423 = vmatpush1.xpose.msra.mxu0 0.0
        %424 = vmatprep.subr.mxu0 0.0
        %425 = vmatpush1.xpose.msra.mxu0 0.0
        %426 = vmatprep.subr.mxu0 0.0
        %427 = vmatpush1.xpose.msra.mxu0 0.0
        %428 = vmatprep.subr.mxu0 0.0
        %429 = vmatpush1.xpose.msra.mxu0 0.0
        %430 = vmatprep.subr.mxu0 0.0
        %431 = vmatpush1.xpose.msra.mxu0 0.0
        %432 = vmatprep.subr.mxu0 0.0
        %433 = vmatpush1.xpose.msra.mxu0 0.0
        %434 = vmatprep.subr.mxu0 0.0
        %435 = vmatpush1.xpose.msra.mxu0 0.0
        %436 = vmatprep.subr.mxu0 0.0
        %437 = vmatpush1.xpose.msra.mxu0 0.0
        %438 = vmatprep.mubr.f32.mxu0 0.0
        %439 = vmatmul.mubr.f32.gmra.mrb[0].mxu0 %v370
        %v440 = vpop.f32.mrb[0].mxu0
        %v441 = vadd.f32 %v364, %v440
        %v442 = vpop.f32.mrb[0].mxu0
        %443 = vdwg.mxu0
        %v444 = vxor.u32 %v441, 2147483648
        %v445 = vmul.f32 %v444, 1.442695
        %v446 = vpow.pop %v445
        %v447 = vadd.f32 %v446, 1.0
        %v448 = vrcp.pop %v447
        %v449 = vmul.f32 1.0, %v448
        %v450 = vld [vmem:[%s261] sm:$0xff]
        %vm451 = vcmp.gt.f32.partialorder %v449, 0.5
        %v452 = vsel %vm451, %v449, 0.0
        %v453 = vmul.f32 %v452, %v450
        %v454 = vpack.c.bf16 %v453, %v453
        %vm455 = vcmask 60416
        %456 = vst.msk [vmem:[%s253] sm:$0xf] %vm455, %v454
        %vm457 = vcmp.le.f32.partialorder %v449, 0.5
        %v458 = vsel %vm457, %v449, 0.0
        %v459 = vmul.f32 %v458, %v450
        %v460 = vpack.c.bf16 %v459, %v459
        %s461 = scalar_lea.vmem %s253, 4 [#allocation3]
        %462 = vst.msk [vmem:[%s461] sm:$0xf] %vm455, %v460
        %s463 = sand.u32 %s163, 1
        %s464 = sand.u32 %s163, 1
        %s465 = smul.addr %s464, 8
        %s466 = scalar_lea.vmem [#allocation3], %s465
        // Predicated region
        $region45: #{com_attention_forward.3} parent=43 // pred_check
          %p467 = pneg %p173
        $region46: #{com_attention_forward.3} parent=43 // pred_check_branch
          %469 = sbr.rel (%p467) target = $region48
        $region47: #{com_attention_forward.3} parent=43 // pred_region
          %s470 = smul.addr %s19, 4
          %s471 = scalar_lea.vmem %s6, %s470
          // Predicated region
          $region49: #{com_attention_forward.3} parent=47 // pred_check
            _
          $region50: #{com_attention_forward.3} parent=47 // pred_check_branch
            %473 = sbr.rel (0) target = $region52
          $region51: #{com_attention_forward.3} parent=47 // pred_region
            // Predicated region
            $region53: #{com_attention_forward.3} parent=51 // pred_check
              _
            $region54: #{com_attention_forward.3} parent=51 // pred_check_branch
              %475 = sbr.rel target = $region56
            $region55: #{com_attention_forward.3} parent=51 // pred_region
              // Predicated region
              $region68: #{com_attention_forward.3} parent=55 // pred_check
                _
              $region69: #{com_attention_forward.3} parent=55 // pred_check_branch
                %492 = sbr.rel (0) target = $region71
              $region70: #{com_attention_forward.3} parent=55 // pred_region
                loop: start=0, step=1, limit=1
                $region72: #{com_attention_forward.3} parent=70 // loop_pre_header
                  _
                $region73: #{com_attention_forward.3} parent=70 // loop_header
                  %s494 = sphi 0, %s498
                  %p495 = scmp.ge.s32.totalorder %s494, 1
                  %s499 = sphi %s466, %s466
                  %s500 = sphi %s471, %s471
                $region74: #{com_attention_forward.3} parent=70 // loop_header_branch
                  %497 = sbr.rel (%p495) target = $region78
                $region75: #{com_attention_forward.3} parent=70 // loop_body
                  _
                $region76: #{com_attention_forward.3} parent=70 // loop_footer
                  %s498 = sadd.s32 1, %s494
                $region77: #{com_attention_forward.3} parent=70 // loop_footer_branch
                  %493 = sbr.rel target = $region73
                $region78: #{com_attention_forward.3} parent=70 // loop_exit
                  _
                loop: start=0, step=1, limit=1
                $region79: #{com_attention_forward.3} parent=70 // loop_pre_header
                  _
                $region80: #{com_attention_forward.3} parent=70 // loop_header
                  %s503 = sphi 0, %s507
                  %p504 = scmp.ge.s32.totalorder %s503, 1
                  %s508 = sphi %s466, %s466
                  %s509 = sphi %s471, %s471
                $region81: #{com_attention_forward.3} parent=70 // loop_header_branch
                  %506 = sbr.rel (%p504) target = $region85
                $region82: #{com_attention_forward.3} parent=70 // loop_body
                  %v510 = vld [vmem:[%s508] sm:$0xf]
                  %511 = vst [vmem:[%s509] sm:$0xf] %v510
                  %v512 = vld [vmem:[%s508 + $0x4] sm:$0xf]
                  %513 = vst [vmem:[%s509 + $0x8] sm:$0xf] %v512
                $region83: #{com_attention_forward.3} parent=70 // loop_footer
                  %s507 = sadd.s32 1, %s503
                $region84: #{com_attention_forward.3} parent=70 // loop_footer_branch
                  %502 = sbr.rel target = $region80
                $region85: #{com_attention_forward.3} parent=70 // loop_exit
                  _
              $region71: #{com_attention_forward.3} parent=55 // pred_fallthru
                _
            $region56: #{com_attention_forward.3} parent=51 // pred_fallthru
              _
            // Predicated region
            $region57: #{com_attention_forward.3} parent=51 // pred_check
              _
            $region58: #{com_attention_forward.3} parent=51 // pred_check_branch
              %477 = sbr.rel (0) target = $region60
            $region59: #{com_attention_forward.3} parent=51 // pred_region
              loop: start=0, step=1, limit=1
              $region61: #{com_attention_forward.3} parent=59 // loop_pre_header
                _
              $region62: #{com_attention_forward.3} parent=59 // loop_header
                %s480 = sphi 0, %s484
                %p481 = scmp.ge.s32.totalorder %s480, 1
                %s485 = sphi %s466, %s466
                %s486 = sphi %s471, %s471
              $region63: #{com_attention_forward.3} parent=59 // loop_header_branch
                %483 = sbr.rel (%p481) target = $region67
              $region64: #{com_attention_forward.3} parent=59 // loop_body
                %v487 = vld [vmem:[%s485] sm:$0xf]
                %488 = vst [vmem:[%s486] sm:$0xf] %v487
                %v489 = vld [vmem:[%s485 + $0x4] sm:$0xf]
                %490 = vst [vmem:[%s486 + $0x8] sm:$0xf] %v489
              $region65: #{com_attention_forward.3} parent=59 // loop_footer
                %s484 = sadd.s32 1, %s480
              $region66: #{com_attention_forward.3} parent=59 // loop_footer_branch
                %479 = sbr.rel target = $region62
              $region67: #{com_attention_forward.3} parent=59 // loop_exit
                _
            $region60: #{com_attention_forward.3} parent=51 // pred_fallthru
              _
          $region52: #{com_attention_forward.3} parent=47 // pred_fallthru
            _
          %514 = vnop
        $region48: #{com_attention_forward.3} parent=43 // pred_fallthru
          _
      $region44: #{com_attention_forward.3} parent=5 // pred_fallthru
        _
      %p515 = scmp.le.s32.totalorder 2, %s14
      // Predicated region
      $region86: #{com_attention_forward.3} parent=5 // pred_check
        %p516 = pneg %p515
      $region87: #{com_attention_forward.3} parent=5 // pred_check_branch
        %518 = sbr.rel (%p516) target = $region89
      $region88: #{com_attention_forward.3} parent=5 // pred_region
        %s519 = ssub.s32 %s14, 2
        // Predicated region
        $region90: #{com_attention_forward.3} parent=88 // pred_check
          %p520 = pneg %p179
        $region91: #{com_attention_forward.3} parent=88 // pred_check_branch
          %522 = sbr.rel (%p520) target = $region93
        $region92: #{com_attention_forward.3} parent=88 // pred_region
          %s523 = sand.u32 %s164, 1
          %s524 = sand.u32 %s164, 1
          %s525 = smul.addr %s524, 8
          %s526 = scalar_lea.vmem [#allocation3], %s525
        $region93: #{com_attention_forward.3} parent=88 // pred_fallthru
          _
      $region89: #{com_attention_forward.3} parent=5 // pred_fallthru
        _
    $region6: #{com_attention_forward.3} parent=1 // loop_footer
      %s18 = sadd.s32 1, %s14
    $region7: #{com_attention_forward.3} parent=1 // loop_footer_branch
      %13 = sbr.rel target = $region3
    $region8: #{com_attention_forward.3} parent=1 // loop_exit
      _

// kernel: com_attention_forward.4
$region0: #{com_attention_forward.4}
  #allocation0 [shape = 'u32[]', space=smem, size = 0x4, offset = 0x4, fixed_abs, tag = 'smem constant byte address 0x4 - core index']
  #allocation1 [shape = 'u32[144,128]{1,0:T(1,128)}', space=vmem, size = 0x12000, scoped, tag = 'internal scratch']
  %s0 = inlined_call_operand.vmem [shape: bf16[2,8,32], index: 0, kind: input, shape index: {}]
  %s1 = inlined_call_operand.vmem [shape: bf16[2,32,96], index: 1, kind: input, shape index: {}]
  %s2 = inlined_call_operand.vmem [shape: f32[2,1,96], index: 2, kind: input, shape index: {}]
  %s3 = inlined_call_operand.vmem [shape: bf16[2,2,8,8], index: 3, kind: input, shape index: {}]
  %s4 = inlined_call_operand.vmem [shape: bf16[2,2,8,32], index: 4, kind: output, shape index: {0}]
  %s5 = inlined_call_operand.vmem [shape: f32[2,2,4,8,8], index: 5, kind: output, shape index: {1}]
  %6 = xla_tuple %s4, %s5
  %s7 = sld [smem:[#allocation0]]
  $region57: #{com_attention_forward.4} parent=0
    _
  %s9 = ssub.s32 1, %s7
  %s10 = scalar_select 0, %s9, %s7
  loop: start=0, step=1, limit=6
  $region2: #{com_attention_forward.4} parent=0 // loop_pre_header
    _
  $region3: #{com_attention_forward.4} parent=0 // loop_header
    %s12 = sphi 0, %s16
    %p13 = scmp.ge.s32.totalorder %s12, 6
    %s19 = sphi 0, %s31
    %s20 = sphi 0, %s27
    %s21 = sphi 0, %s19
    %s22 = sphi 0, %s20
    %s23 = sphi 0, %s21
    %s24 = sphi 0, %s22
    %s34 = sphi 0, %s36
    %s37 = sphi 0, %s34
    %s38 = sphi 0, %s37
    %s54 = sphi 0, %s38
    %s60 = sphi 0, %s62
    %s63 = sphi 0, %s60
    %s64 = sphi 0, %s63
    %s80 = sphi 0, %s64
    %s86 = sphi 0, %s88
    %s89 = sphi 0, %s86
    %s90 = sphi 0, %s89
    %s106 = sphi 0, %s90
    %s114 = sphi 0, %s116
    %s117 = sphi 0, %s114
    %s118 = sphi 0, %s117
    %s134 = sphi 0, %s118
    %s142 = sphi 0, %s144
    %s145 = sphi 0, %s142
    %s146 = sphi 0, %s145
    %s162 = sphi 0, %s146
    %s170 = sphi 0, %s172
    %s173 = sphi 0, %s170
    %s174 = sphi 0, %s173
    %s190 = sphi 0, %s174
  $region4: #{com_attention_forward.4} parent=0 // loop_header_branch
    %15 = sbr.rel (%p13) target = $region8
  $region5: #{com_attention_forward.4} parent=0 // loop_body
    %s17 = ssub.s32 %s12, 1
    %s18 = ssub.s32 %s12, 2
    %s25 = sadd.s32 1, %s20
    %p26 = scmp.ge.s32.totalorder %s25, 2
    %s27 = scalar_select %p26, 0, %s25
    %s28 = sadd.s32 1, %s19
    %s29 = scalar_select %p26, %s28, %s19
    %p30 = scmp.ge.s32.totalorder %s29, 2
    %s31 = scalar_select %p30, 0, %s29
    %s32 = ssub.s32 %s20, %s27
    %p33 = scmp.eq.s32.totalorder %s32, 0
    %s35 = sadd.s32 %s34, 1
    %s36 = scalar_select %p33, %s34, %s35
    %p39 = pneg %p33
    %p40 = scmp.eq.s32.totalorder %s12, 3
    %p41 = por %p39, %p40
    %p42 = scmp.ne.s32.totalorder %s34, %s37
    %p43 = scmp.eq.s32.totalorder %s12, 0
    %p44 = por %p42, %p43
    %p45 = scmp.ne.s32.totalorder %s34, %s37
    %p46 = scmp.eq.s32.totalorder %s17, 3
    %p47 = por %p45, %p46
    %p48 = scmp.ne.s32.totalorder %s37, %s38
    %p49 = scmp.eq.s32.totalorder %s17, 0
    %p50 = por %p48, %p49
    %p51 = scmp.ne.s32.totalorder %s37, %s38
    %p52 = scmp.eq.s32.totalorder %s18, 3
    %p53 = por %p51, %p52
    %p55 = scmp.ne.s32.totalorder %s38, %s54
    %p56 = scmp.eq.s32.totalorder %s18, 0
    %p57 = por %p55, %p56
    %s58 = ssub.s32 %s19, %s31
    %p59 = scmp.eq.s32.totalorder %s58, 0
    %s61 = sadd.s32 %s60, 1
    %s62 = scalar_select %p59, %s60, %s61
    %p65 = pneg %p59
    %p66 = scmp.eq.s32.totalorder %s12, 3
    %p67 = por %p65, %p66
    %p68 = scmp.ne.s32.totalorder %s60, %s63
    %p69 = scmp.eq.s32.totalorder %s12, 0
    %p70 = por %p68, %p69
    %p71 = scmp.ne.s32.totalorder %s60, %s63
    %p72 = scmp.eq.s32.totalorder %s17, 3
    %p73 = por %p71, %p72
    %p74 = scmp.ne.s32.totalorder %s63, %s64
    %p75 = scmp.eq.s32.totalorder %s17, 0
    %p76 = por %p74, %p75
    %p77 = scmp.ne.s32.totalorder %s63, %s64
    %p78 = scmp.eq.s32.totalorder %s18, 3
    %p79 = por %p77, %p78
    %p81 = scmp.ne.s32.totalorder %s64, %s80
    %p82 = scmp.eq.s32.totalorder %s18, 0
    %p83 = por %p81, %p82
    %s84 = ssub.s32 %s19, %s31
    %p85 = scmp.eq.s32.totalorder %s84, 0
    %s87 = sadd.s32 %s86, 1
    %s88 = scalar_select %p85, %s86, %s87
    %p91 = pneg %p85
    %p92 = scmp.eq.s32.totalorder %s12, 3
    %p93 = por %p91, %p92
    %p94 = scmp.ne.s32.totalorder %s86, %s89
    %p95 = scmp.eq.s32.totalorder %s12, 0
    %p96 = por %p94, %p95
    %p97 = scmp.ne.s32.totalorder %s86, %s89
    %p98 = scmp.eq.s32.totalorder %s17, 3
    %p99 = por %p97, %p98
    %p100 = scmp.ne.s32.totalorder %s89, %s90
    %p101 = scmp.eq.s32.totalorder %s17, 0
    %p102 = por %p100, %p101
    %p103 = scmp.ne.s32.totalorder %s89, %s90
    %p104 = scmp.eq.s32.totalorder %s18, 3
    %p105 = por %p103, %p104
    %p107 = scmp.ne.s32.totalorder %s90, %s106
    %p108 = scmp.eq.s32.totalorder %s18, 0
    %p109 = por %p107, %p108
    %s110 = ssub.s32 %s19, %s31
    %s111 = ssub.s32 %s20, %s27
    %s112 = sor.u32 %s110, %s111
    %p113 = scmp.eq.s32.totalorder %s112, 0
    %s115 = sadd.s32 %s114, 1
    %s116 = scalar_select %p113, %s114, %s115
    %p119 = pneg %p113
    %p120 = scmp.eq.s32.totalorder %s12, 3
    %p121 = por %p119, %p120
    %p122 = scmp.ne.s32.totalorder %s114, %s117
    %p123 = scmp.eq.s32.totalorder %s12, 0
    %p124 = por %p122, %p123
    %p125 = scmp.ne.s32.totalorder %s114, %s117
    %p126 = scmp.eq.s32.totalorder %s17, 3
    %p127 = por %p125, %p126
    %p128 = scmp.ne.s32.totalorder %s117, %s118
    %p129 = scmp.eq.s32.totalorder %s17, 0
    %p130 = por %p128, %p129
    %p131 = scmp.ne.s32.totalorder %s117, %s118
    %p132 = scmp.eq.s32.totalorder %s18, 3
    %p133 = por %p131, %p132
    %p135 = scmp.ne.s32.totalorder %s118, %s134
    %p136 = scmp.eq.s32.totalorder %s18, 0
    %p137 = por %p135, %p136
    %s138 = ssub.s32 %s19, %s31
    %s139 = ssub.s32 %s20, %s27
    %s140 = sor.u32 %s138, %s139
    %p141 = scmp.eq.s32.totalorder %s140, 0
    %s143 = sadd.s32 %s142, 1
    %s144 = scalar_select %p141, %s142, %s143
    %p147 = pneg %p141
    %p148 = scmp.eq.s32.totalorder %s12, 3
    %p149 = por %p147, %p148
    %p150 = scmp.ne.s32.totalorder %s142, %s145
    %p151 = scmp.eq.s32.totalorder %s12, 0
    %p152 = por %p150, %p151
    %p153 = scmp.ne.s32.totalorder %s142, %s145
    %p154 = scmp.eq.s32.totalorder %s17, 3
    %p155 = por %p153, %p154
    %p156 = scmp.ne.s32.totalorder %s145, %s146
    %p157 = scmp.eq.s32.totalorder %s17, 0
    %p158 = por %p156, %p157
    %p159 = scmp.ne.s32.totalorder %s145, %s146
    %p160 = scmp.eq.s32.totalorder %s18, 3
    %p161 = por %p159, %p160
    %p163 = scmp.ne.s32.totalorder %s146, %s162
    %p164 = scmp.eq.s32.totalorder %s18, 0
    %p165 = por %p163, %p164
    %s166 = ssub.s32 %s19, %s31
    %s167 = ssub.s32 %s20, %s27
    %s168 = sor.u32 %s166, %s167
    %p169 = scmp.eq.s32.totalorder %s168, 0
    %s171 = sadd.s32 %s170, 1
    %s172 = scalar_select %p169, %s170, %s171
    %p175 = pneg %p169
    %p176 = scmp.eq.s32.totalorder %s12, 3
    %p177 = por %p175, %p176
    %p178 = scmp.ne.s32.totalorder %s170, %s173
    %p179 = scmp.eq.s32.totalorder %s12, 0
    %p180 = por %p178, %p179
    %p181 = scmp.ne.s32.totalorder %s170, %s173
    %p182 = scmp.eq.s32.totalorder %s17, 3
    %p183 = por %p181, %p182
    %p184 = scmp.ne.s32.totalorder %s173, %s174
    %p185 = scmp.eq.s32.totalorder %s17, 0
    %p186 = por %p184, %p185
    %p187 = scmp.ne.s32.totalorder %s173, %s174
    %p188 = scmp.eq.s32.totalorder %s18, 3
    %p189 = por %p187, %p188
    %p191 = scmp.ne.s32.totalorder %s174, %s190
    %p192 = scmp.eq.s32.totalorder %s18, 0
    %p193 = por %p191, %p192
    %p194 = scmp.le.s32.totalorder 1, %s12
    %p195 = scmp.lt.s32.totalorder %s12, 5
    %p196 = pnand %p194, %p195
    %p197 = pneg %p196
    // Predicated region
    $region9: #{com_attention_forward.4} parent=5 // pred_check
      _
    $region10: #{com_attention_forward.4} parent=5 // pred_check_branch
      %199 = sbr.rel (%p196) target = $region12
    $region11: #{com_attention_forward.4} parent=5 // pred_region
      %s200 = ssub.s32 %s12, 1
    $region12: #{com_attention_forward.4} parent=5 // pred_fallthru
      _
    %p201 = scmp.lt.s32.totalorder %s12, 4
    // Predicated region
    $region13: #{com_attention_forward.4} parent=5 // pred_check
      %p202 = pneg %p201
    $region14: #{com_attention_forward.4} parent=5 // pred_check_branch
      %204 = sbr.rel (%p202) target = $region16
    $region15: #{com_attention_forward.4} parent=5 // pred_region
      // Predicated region
      $region17: #{com_attention_forward.4} parent=15 // pred_check
        %p205 = pneg %p44
      $region18: #{com_attention_forward.4} parent=15 // pred_check_branch
        %207 = sbr.rel (%p205) target = $region20
      $region19: #{com_attention_forward.4} parent=15 // pred_region
        %p208 = scmp.lt.s32.totalorder %s20, 1
        %s209 = scalar_select %p208, %s20, 1
        %s210 = smul.addr %s209, 4
        %s211 = scalar_lea.vmem %s0, %s210
      $region20: #{com_attention_forward.4} parent=15 // pred_fallthru
        _
      // Predicated region
      $region21: #{com_attention_forward.4} parent=15 // pred_check
        %p212 = pneg %p70
      $region22: #{com_attention_forward.4} parent=15 // pred_check_branch
        %214 = sbr.rel (%p212) target = $region24
      $region23: #{com_attention_forward.4} parent=15 // pred_region
        %p215 = scmp.lt.s32.totalorder %s19, 1
        %s216 = scalar_select %p215, %s19, 1
        %s217 = smul.addr %s216, 4
        %s218 = smul.addr %s217, 4
        %s219 = scalar_lea.vmem %s1, %s218
      $region24: #{com_attention_forward.4} parent=15 // pred_fallthru
        _
      // Predicated region
      $region25: #{com_attention_forward.4} parent=15 // pred_check
        %p220 = pneg %p96
      $region26: #{com_attention_forward.4} parent=15 // pred_check_branch
        %222 = sbr.rel (%p220) target = $region28
      $region27: #{com_attention_forward.4} parent=15 // pred_region
        %p223 = scmp.lt.s32.totalorder %s19, 1
        %s224 = scalar_select %p223, %s19, 1
        %s225 = scalar_lea.vmem %s2, %s224
      $region28: #{com_attention_forward.4} parent=15 // pred_fallthru
        _
      // Predicated region
      $region29: #{com_attention_forward.4} parent=15 // pred_check
        %p226 = pneg %p124
      $region30: #{com_attention_forward.4} parent=15 // pred_check_branch
        %228 = sbr.rel (%p226) target = $region32
      $region31: #{com_attention_forward.4} parent=15 // pred_region
        %p229 = scmp.lt.s32.totalorder %s19, 1
        %s230 = scalar_select %p229, %s19, 1
        %p231 = scmp.lt.s32.totalorder %s20, 1
        %s232 = scalar_select %p231, %s20, 1
        %s233 = smul.addr %s230, 2
        %s234 = sadd.s32 %s232, %s233
        %s235 = smul.addr %s234, 4
        %s236 = scalar_lea.vmem %s3, %s235
      $region32: #{com_attention_forward.4} parent=15 // pred_fallthru
        _
    $region16: #{com_attention_forward.4} parent=5 // pred_fallthru
      _
    %p237 = scmp.le.s32.totalorder 1, %s12
    %p238 = scmp.lt.s32.totalorder %s12, 5
    %p239 = pnand %p237, %p238
    %p240 = pneg %p239
    // Predicated region
    $region33: #{com_attention_forward.4} parent=5 // pred_check
      _
    $region34: #{com_attention_forward.4} parent=5 // pred_check_branch
      %242 = sbr.rel (%p239) target = $region36
    $region35: #{com_attention_forward.4} parent=5 // pred_region
      %s243 = ssub.s32 %s12, 1
      %p244 = scmp.lt.s32.totalorder %s22, 1
      %s245 = scalar_select %p244, %s22, 1
      %s246 = smul.addr %s245, 4
      %s247 = scalar_lea.vmem %s0, %s246
      %p248 = pneg %p50
      %p249 = pneg %p47
      %p250 = scmp.lt.s32.totalorder %s21, 1
      %s251 = scalar_select %p250, %s21, 1
      %s252 = smul.addr %s251, 4
      %s253 = smul.addr %s252, 4
      %s254 = scalar_lea.vmem %s1, %s253
      %p255 = pneg %p76
      %p256 = pneg %p73
      %p257 = scmp.lt.s32.totalorder %s21, 1
      %s258 = scalar_select %p257, %s21, 1
      %s259 = scalar_lea.vmem %s2, %s258
      %p260 = pneg %p102
      %p261 = pneg %p99
      %p262 = scmp.lt.s32.totalorder %s21, 1
      %s263 = scalar_select %p262, %s21, 1
      %p264 = scmp.lt.s32.totalorder %s22, 1
      %s265 = scalar_select %p264, %s22, 1
      %s266 = smul.addr %s263, 2
      %s267 = sadd.s32 %s265, %s266
      %s268 = smul.addr %s267, 4
      %s269 = scalar_lea.vmem %s3, %s268
      %p270 = pneg %p130
      %p271 = pneg %p127
      %p272 = pneg %p158
      %p273 = pneg %p155
      %p274 = scmp.lt.s32.totalorder %s21, 1
      %s275 = scalar_select %p274, %s21, 1
      %p276 = scmp.lt.s32.totalorder %s22, 1
      %s277 = scalar_select %p276, %s22, 1
      %s278 = smul.addr %s275, 2
      %s279 = sadd.s32 %s277, %s278
      %s280 = smul.addr %s279, 4
      %s281 = scalar_lea.vmem %s4, %s280
      %p282 = pneg %p186
      %p283 = pneg %p183
      %p284 = scmp.lt.s32.totalorder %s21, 1
      %s285 = scalar_select %p284, %s21, 1
      %p286 = scmp.lt.s32.totalorder %s22, 1
      %s287 = scalar_select %p286, %s22, 1
      %s288 = smul.addr %s287, 4
      %s289 = smul.addr %s285, 8
      %s290 = sadd.s32 %s288, %s289
      %s291 = smul.addr %s290, 8
      %s292 = scalar_lea.vmem %s5, %s291
      %p293 = scmp.lt.s32.totalorder %s22, 1
      %s294 = scalar_select %p293, %s22, 1
      %s295 = smul.addr %s294, 4
      %s296 = scalar_lea.vmem %s0, %s295
      %p297 = scmp.lt.s32.totalorder %s21, 1
      %s298 = scalar_select %p297, %s21, 1
      %s299 = smul.addr %s298, 4
      %s300 = smul.addr %s299, 4
      %s301 = scalar_lea.vmem %s1, %s300
      %p302 = scmp.lt.s32.totalorder %s21, 1
      %s303 = scalar_select %p302, %s21, 1
      %s304 = scalar_lea.vmem %s2, %s303
      %p305 = scmp.lt.s32.totalorder %s21, 1
      %s306 = scalar_select %p305, %s21, 1
      %p307 = scmp.lt.s32.totalorder %s22, 1
      %s308 = scalar_select %p307, %s22, 1
      %s309 = smul.addr %s306, 2
      %s310 = sadd.s32 %s308, %s309
      %s311 = smul.addr %s310, 4
      %s312 = scalar_lea.vmem %s3, %s311
      %p313 = scmp.lt.s32.totalorder %s21, 1
      %s314 = scalar_select %p313, %s21, 1
      %p315 = scmp.lt.s32.totalorder %s22, 1
      %s316 = scalar_select %p315, %s22, 1
      %s317 = smul.addr %s314, 2
      %s318 = sadd.s32 %s316, %s317
      %s319 = smul.addr %s318, 4
      %s320 = scalar_lea.vmem %s4, %s319
      %p321 = scmp.lt.s32.totalorder %s21, 1
      %s322 = scalar_select %p321, %s21, 1
      %p323 = scmp.lt.s32.totalorder %s22, 1
      %s324 = scalar_select %p323, %s22, 1
      %s325 = smul.addr %s324, 4
      %s326 = smul.addr %s322, 8
      %s327 = sadd.s32 %s325, %s326
      %s328 = smul.addr %s327, 8
      %s329 = scalar_lea.vmem %s5, %s328
      %v333 = vld [vmem:[%s296] sm:$0xf]
      %v334 = vld [vmem:[%s301] sm:$0xf]
      %v335 = vld [vmem:[%s301 + $0x4] sm:$0xf]
      %v336 = vld [vmem:[%s301 + $0x8] sm:$0xf]
      %v337 = vld [vmem:[%s301 + $0xc] sm:$0xf]
      %v338 = vld [vmem:[%s304] sm:$0x1]
      %v340 = vlaneseq
      %v341 = vshrl.u32 %v340, 7
      %v342 = vsub.s32 0, %v341
      %v343 = vrot.slane %v338, %v342
      %v349 = vunpack.c.l.b16 %v334
      %v350 = vunpack.c.l.b16 %v335
      %v351 = vunpack.c.l.b16 %v336
      %v352 = vunpack.c.l.b16 %v337
      %v353 = vpack.c.b16 %v350, %v349
      %v354 = vpack.c.b16 %v352, %v351
      %vm357 = vcmask 261120
      %v359 = vsel %vm357, %v333, 0
      %361 = vmatprep.subr.bf16.mxu0 0
      %362 = vmatpush1.bf16.msra.mxu0 %v353
      %363 = vmatprep.subr.bf16.mxu0 0
      %364 = vmatpush1.bf16.msra.mxu0 %v354
      %365 = vmatprep.subr.bf16.mxu0 0
      %366 = vmatpush1.bf16.msra.mxu0 0
      %367 = vmatprep.subr.bf16.mxu0 0
      %368 = vmatpush1.bf16.msra.mxu0 0
      %369 = vmatprep.subr.bf16.mxu0 0
      %370 = vmatpush1.bf16.msra.mxu0 0
      %371 = vmatprep.subr.bf16.mxu0 0
      %372 = vmatpush1.bf16.msra.mxu0 0
      %373 = vmatprep.subr.bf16.mxu0 0
      %374 = vmatpush1.bf16.msra.mxu0 0
      %375 = vmatprep.subr.bf16.mxu0 0
      %376 = vmatpush1.bf16.msra.mxu0 0
      %377 = vmatprep.subr.bf16.mxu0 0
      %378 = vmatpush1.bf16.msra.mxu0 0
      %379 = vmatprep.subr.bf16.mxu0 0
      %380 = vmatpush1.bf16.msra.mxu0 0
      %381 = vmatprep.subr.bf16.mxu0 0
      %382 = vmatpush1.bf16.msra.mxu0 0
      %383 = vmatprep.subr.bf16.mxu0 0
      %384 = vmatpush1.bf16.msra.mxu0 0
      %385 = vmatprep.subr.bf16.mxu0 0
      %386 = vmatpush1.bf16.msra.mxu0 0
      %387 = vmatprep.subr.bf16.mxu0 0
      %388 = vmatpush1.bf16.msra.mxu0 0
      %389 = vmatprep.subr.bf16.mxu0 0
      %390 = vmatpush1.bf16.msra.mxu0 0
      %391 = vmatprep.subr.bf16.mxu0 0
      %392 = vmatpush1.bf16.msra.mxu0 0
      %393 = vmatprep.mubr.bf16.mxu0 0
      %394 = vmatmul.mubr.bf16.gmra.mrb[0].mxu0 %v359
      %v395 = vpop.f32.mrb[0].mxu0
      %v396 = vadd.f32 %v343, %v395
      %v397 = vpop.f32.mrb[0].mxu0
      %v398 = vpop.f32.mrb[0].mxu0
      %v399 = vpop.f32.mrb[0].mxu0
      %400 = vdwg.mxu0
      %v401 = vpack.c.bf16 %v396, %v396
      %v402 = vld [vmem:[%s312] sm:$0xf]
      %vm403 = vcmp.eq.bf16.partialorder %v402, 0
      %405 = vrot.lane.b32.xlu0 %v401, 96
      %v406 = vpop.permute.xlu0 %405
      %vm407 = vcmask 64512
      %v409 = vsel %vm407, %v401, 0
      %v412 = vsel %vm407, %v406, 0
      %414 = vmatprep.subr.bf16.mxu0 0
      %415 = vmatpush1.bf16.xpose.msra.mxu0 %v412
      %416 = vmatprep.subr.bf16.mxu0 0
      %417 = vmatpush1.bf16.xpose.msra.mxu0 0
      %418 = vmatprep.subr.bf16.mxu0 0
      %419 = vmatpush1.bf16.xpose.msra.mxu0 0
      %420 = vmatprep.subr.bf16.mxu0 0
      %421 = vmatpush1.bf16.xpose.msra.mxu0 0
      %422 = vmatprep.subr.bf16.mxu0 0
      %423 = vmatpush1.bf16.xpose.msra.mxu0 0
      %424 = vmatprep.subr.bf16.mxu0 0
      %425 = vmatpush1.bf16.xpose.msra.mxu0 0
      %426 = vmatprep.subr.bf16.mxu0 0
      %427 = vmatpush1.bf16.xpose.msra.mxu0 0
      %428 = vmatprep.subr.bf16.mxu0 0
      %429 = vmatpush1.bf16.xpose.msra.mxu0 0
      %430 = vmatprep.subr.bf16.mxu0 0
      %431 = vmatpush1.bf16.xpose.msra.mxu0 0
      %432 = vmatprep.subr.bf16.mxu0 0
      %433 = vmatpush1.bf16.xpose.msra.mxu0 0
      %434 = vmatprep.subr.bf16.mxu0 0
      %435 = vmatpush1.bf16.xpose.msra.mxu0 0
      %436 = vmatprep.subr.bf16.mxu0 0
      %437 = vmatpush1.bf16.xpose.msra.mxu0 0
      %438 = vmatprep.subr.bf16.mxu0 0
      %439 = vmatpush1.bf16.xpose.msra.mxu0 0
      %440 = vmatprep.subr.bf16.mxu0 0
      %441 = vmatpush1.bf16.xpose.msra.mxu0 0
      %442 = vmatprep.subr.bf16.mxu0 0
      %443 = vmatpush1.bf16.xpose.msra.mxu0 0
      %444 = vmatprep.subr.bf16.mxu0 0
      %445 = vmatpush1.bf16.xpose.msra.mxu0 0
      %446 = vmatprep.mubr.bf16.mxu0 0
      %447 = vmatmul.mubr.bf16.gmra.mrb[0].mxu0 %v409
      %v448 = vpop.f32.mrb[0].mxu0
      %v449 = vadd.f32 0.0, %v448
      %v450 = vpop.f32.mrb[0].mxu0
      %v451 = vpop.f32.mrb[0].mxu0
      %v452 = vpop.f32.mrb[0].mxu0
      %453 = vdwg.mxu0
      %v454 = vsel %vm403, 65537, 0
      %v455 = vunpack.c.l.b16 %v454
      %vm456 = vcmp.ne.s32.totalorder %v455, 0
      %v457 = vsel %vm456, -1e+09, %v449
      %v458 = vsel %vm407, %v457, -inf
      %459 = vmax.xlane.f32.xlu0 %v458
      %v460 = vpop.xlane.xlu0 %459
      %v461 = vsub.f32 %v457, %v460
      %v462 = vmul.f32 %v461, 1.442695
      %v463 = vpow.pop %v462
      %v464 = vsel %vm407, %v463, 0.0
      %465 = vadd.xlane.f32.xlu0 %v464
      %v466 = vpop.xlane.xlu0 %465
      %v467 = vrcp.pop %v466
      %v468 = vmul.f32 %v463, %v467
      %v469 = vpack.c.bf16 %v468, %v468
      %470 = vrot.lane.b32.xlu0 %v401, 64
      %v471 = vpop.permute.xlu0 %470
      %v473 = vsel %vm407, %v469, 0
      %vm475 = vcmask 1043456
      %v477 = vsel %vm475, %v471, 0
      %479 = vmatprep.subr.bf16.mxu0 0
      %480 = vmatpush1.bf16.msra.mxu0 %v477
      %481 = vmatprep.subr.bf16.mxu0 0
      %482 = vmatpush1.bf16.msra.mxu0 0
      %483 = vmatprep.subr.bf16.mxu0 0
      %484 = vmatpush1.bf16.msra.mxu0 0
      %485 = vmatprep.subr.bf16.mxu0 0
      %486 = vmatpush1.bf16.msra.mxu0 0
      %487 = vmatprep.subr.bf16.mxu0 0
      %488 = vmatpush1.bf16.msra.mxu0 0
      %489 = vmatprep.subr.bf16.mxu0 0
      %490 = vmatpush1.bf16.msra.mxu0 0
      %491 = vmatprep.subr.bf16.mxu0 0
      %492 = vmatpush1.bf16.msra.mxu0 0
      %493 = vmatprep.subr.bf16.mxu0 0
      %494 = vmatpush1.bf16.msra.mxu0 0
      %495 = vmatprep.subr.bf16.mxu0 0
      %496 = vmatpush1.bf16.msra.mxu0 0
      %497 = vmatprep.subr.bf16.mxu0 0
      %498 = vmatpush1.bf16.msra.mxu0 0
      %499 = vmatprep.subr.bf16.mxu0 0
      %500 = vmatpush1.bf16.msra.mxu0 0
      %501 = vmatprep.subr.bf16.mxu0 0
      %502 = vmatpush1.bf16.msra.mxu0 0
      %503 = vmatprep.subr.bf16.mxu0 0
      %504 = vmatpush1.bf16.msra.mxu0 0
      %505 = vmatprep.subr.bf16.mxu0 0
      %506 = vmatpush1.bf16.msra.mxu0 0
      %507 = vmatprep.subr.bf16.mxu0 0
      %508 = vmatpush1.bf16.msra.mxu0 0
      %509 = vmatprep.subr.bf16.mxu0 0
      %510 = vmatpush1.bf16.msra.mxu0 0
      %511 = vmatprep.mubr.bf16.mxu0 0
      %512 = vmatmul.mubr.bf16.gmra.mrb[0].mxu0 %v473
      %v513 = vpop.f32.mrb[0].mxu0
      %v514 = vadd.f32 0.0, %v513
      %v515 = vpop.f32.mrb[0].mxu0
      %v516 = vpop.f32.mrb[0].mxu0
      %v517 = vpop.f32.mrb[0].mxu0
      %518 = vdwg.mxu0
      %519 = vst.msk [vmem:[%s329] sm:$0xff] %vm407, %v468
      %520 = vrot.lane.b32.xlu0 %v401, 120
      %v521 = vpop.permute.xlu0 %520
      %522 = vrot.lane.b32.xlu0 %v401, 88
      %v523 = vpop.permute.xlu0 %522
      %v525 = vsel %vm407, %v521, 0
      %v528 = vsel %vm407, %v523, 0
      %530 = vmatprep.subr.bf16.mxu0 0
      %531 = vmatpush1.bf16.xpose.msra.mxu0 %v528
      %532 = vmatprep.subr.bf16.mxu0 0
      %533 = vmatpush1.bf16.xpose.msra.mxu0 0
      %534 = vmatprep.subr.bf16.mxu0 0
      %535 = vmatpush1.bf16.xpose.msra.mxu0 0
      %536 = vmatprep.subr.bf16.mxu0 0
      %537 = vmatpush1.bf16.xpose.msra.mxu0 0
      %538 = vmatprep.subr.bf16.mxu0 0
      %539 = vmatpush1.bf16.xpose.msra.mxu0 0
      %540 = vmatprep.subr.bf16.mxu0 0
      %541 = vmatpush1.bf16.xpose.msra.mxu0 0
      %542 = vmatprep.subr.bf16.mxu0 0
      %543 = vmatpush1.bf16.xpose.msra.mxu0 0
      %544 = vmatprep.subr.bf16.mxu0 0
      %545 = vmatpush1.bf16.xpose.msra.mxu0 0
      %546 = vmatprep.subr.bf16.mxu0 0
      %547 = vmatpush1.bf16.xpose.msra.mxu0 0
      %548 = vmatprep.subr.bf16.mxu0 0
      %549 = vmatpush1.bf16.xpose.msra.mxu0 0
      %550 = vmatprep.subr.bf16.mxu0 0
      %551 = vmatpush1.bf16.xpose.msra.mxu0 0
      %552 = vmatprep.subr.bf16.mxu0 0
      %553 = vmatpush1.bf16.xpose.msra.mxu0 0
      %554 = vmatprep.subr.bf16.mxu0 0
      %555 = vmatpush1.bf16.xpose.msra.mxu0 0
      %556 = vmatprep.subr.bf16.mxu0 0
      %557 = vmatpush1.bf16.xpose.msra.mxu0 0
      %558 = vmatprep.subr.bf16.mxu0 0
      %559 = vmatpush1.bf16.xpose.msra.mxu0 0
      %560 = vmatprep.subr.bf16.mxu0 0
      %561 = vmatpush1.bf16.xpose.msra.mxu0 0
      %562 = vmatprep.mubr.bf16.mxu0 0
      %563 = vmatmul.mubr.bf16.gmra.mrb[0].mxu0 %v525
      %v564 = vpop.f32.mrb[0].mxu0
      %v565 = vadd.f32 0.0, %v564
      %v566 = vpop.f32.mrb[0].mxu0
      %v567 = vpop.f32.mrb[0].mxu0
      %v568 = vpop.f32.mrb[0].mxu0
      %569 = vdwg.mxu0
      %v570 = vsel %vm456, -1e+09, %v565
      %v571 = vsel %vm407, %v570, -inf
      %572 = vmax.xlane.f32.xlu0 %v571
      %v573 = vpop.xlane.xlu0 %572
      %v574 = vsub.f32 %v570, %v573
      %v575 = vmul.f32 %v574, 1.442695
      %v576 = vpow.pop %v575
      %v577 = vsel %vm407, %v576, 0.0
      %578 = vadd.xlane.f32.xlu0 %v577
      %v579 = vpop.xlane.xlu0 %578
      %v580 = vrcp.pop %v579
      %v581 = vmul.f32 %v576, %v580
      %v582 = vpack.c.bf16 %v581, %v581
      %583 = vrot.lane.b32.xlu0 %v401, 56
      %v584 = vpop.permute.xlu0 %583
      %v586 = vsel %vm407, %v582, 0
      %v589 = vsel %vm475, %v584, 0
      %591 = vmatprep.subr.bf16.mxu0 0
      %592 = vmatpush1.bf16.msra.mxu0 %v589
      %593 = vmatprep.subr.bf16.mxu0 0
      %594 = vmatpush1.bf16.msra.mxu0 0
      %595 = vmatprep.subr.bf16.mxu0 0
      %596 = vmatpush1.bf16.msra.mxu0 0
      %597 = vmatprep.subr.bf16.mxu0 0
      %598 = vmatpush1.bf16.msra.mxu0 0
      %599 = vmatprep.subr.bf16.mxu0 0
      %600 = vmatpush1.bf16.msra.mxu0 0
      %601 = vmatprep.subr.bf16.mxu0 0
      %602 = vmatpush1.bf16.msra.mxu0 0
      %603 = vmatprep.subr.bf16.mxu0 0
      %604 = vmatpush1.bf16.msra.mxu0 0
      %605 = vmatprep.subr.bf16.mxu0 0
      %606 = vmatpush1.bf16.msra.mxu0 0
      %607 = vmatprep.subr.bf16.mxu0 0
      %608 = vmatpush1.bf16.msra.mxu0 0
      %609 = vmatprep.subr.bf16.mxu0 0
      %610 = vmatpush1.bf16.msra.mxu0 0
      %611 = vmatprep.subr.bf16.mxu0 0
      %612 = vmatpush1.bf16.msra.mxu0 0
      %613 = vmatprep.subr.bf16.mxu0 0
      %614 = vmatpush1.bf16.msra.mxu0 0
      %615 = vmatprep.subr.bf16.mxu0 0
      %616 = vmatpush1.bf16.msra.mxu0 0
      %617 = vmatprep.subr.bf16.mxu0 0
      %618 = vmatpush1.bf16.msra.mxu0 0
      %619 = vmatprep.subr.bf16.mxu0 0
      %620 = vmatpush1.bf16.msra.mxu0 0
      %621 = vmatprep.subr.bf16.mxu0 0
      %622 = vmatpush1.bf16.msra.mxu0 0
      %623 = vmatprep.mubr.bf16.mxu0 0
      %624 = vmatmul.mubr.bf16.gmra.mrb[0].mxu0 %v586
      %v625 = vpop.f32.mrb[0].mxu0
      %v626 = vadd.f32 0.0, %v625
      %v627 = vpop.f32.mrb[0].mxu0
      %v628 = vpop.f32.mrb[0].mxu0
      %v629 = vpop.f32.mrb[0].mxu0
      %630 = vdwg.mxu0
      %s631 = scalar_lea.vmem %s329, 8
      %632 = vst.msk [vmem:[%s631] sm:$0xff] %vm407, %v581
      %633 = vrot.lane.b32.xlu0 %v401, 112
      %v634 = vpop.permute.xlu0 %633
      %635 = vrot.lane.b32.xlu0 %v401, 80
      %v636 = vpop.permute.xlu0 %635
      %v638 = vsel %vm407, %v634, 0
      %v641 = vsel %vm407, %v636, 0
      %643 = vmatprep.subr.bf16.mxu0 0
      %644 = vmatpush1.bf16.xpose.msra.mxu0 %v641
      %645 = vmatprep.subr.bf16.mxu0 0
      %646 = vmatpush1.bf16.xpose.msra.mxu0 0
      %647 = vmatprep.subr.bf16.mxu0 0
      %648 = vmatpush1.bf16.xpose.msra.mxu0 0
      %649 = vmatprep.subr.bf16.mxu0 0
      %650 = vmatpush1.bf16.xpose.msra.mxu0 0
      %651 = vmatprep.subr.bf16.mxu0 0
      %652 = vmatpush1.bf16.xpose.msra.mxu0 0
      %653 = vmatprep.subr.bf16.mxu0 0
      %654 = vmatpush1.bf16.xpose.msra.mxu0 0
      %655 = vmatprep.subr.bf16.mxu0 0
      %656 = vmatpush1.bf16.xpose.msra.mxu0 0
      %657 = vmatprep.subr.bf16.mxu0 0
      %658 = vmatpush1.bf16.xpose.msra.mxu0 0
      %659 = vmatprep.subr.bf16.mxu0 0
      %660 = vmatpush1.bf16.xpose.msra.mxu0 0
      %661 = vmatprep.subr.bf16.mxu0 0
      %662 = vmatpush1.bf16.xpose.msra.mxu0 0
      %663 = vmatprep.subr.bf16.mxu0 0
      %664 = vmatpush1.bf16.xpose.msra.mxu0 0
      %665 = vmatprep.subr.bf16.mxu0 0
      %666 = vmatpush1.bf16.xpose.msra.mxu0 0
      %667 = vmatprep.subr.bf16.mxu0 0
      %668 = vmatpush1.bf16.xpose.msra.mxu0 0
      %669 = vmatprep.subr.bf16.mxu0 0
      %670 = vmatpush1.bf16.xpose.msra.mxu0 0
      %671 = vmatprep.subr.bf16.mxu0 0
      %672 = vmatpush1.bf16.xpose.msra.mxu0 0
      %673 = vmatprep.subr.bf16.mxu0 0
      %674 = vmatpush1.bf16.xpose.msra.mxu0 0
      %675 = vmatprep.mubr.bf16.mxu0 0
      %676 = vmatmul.mubr.bf16.gmra.mrb[0].mxu0 %v638
      %v677 = vpop.f32.mrb[0].mxu0
      %v678 = vadd.f32 0.0, %v677
      %v679 = vpop.f32.mrb[0].mxu0
      %v680 = vpop.f32.mrb[0].mxu0
      %v681 = vpop.f32.mrb[0].mxu0
      %682 = vdwg.mxu0
      %v683 = vsel %vm456, -1e+09, %v678
      %v684 = vsel %vm407, %v683, -inf
      %685 = vmax.xlane.f32.xlu0 %v684
      %v686 = vpop.xlane.xlu0 %685
      %v687 = vsub.f32 %v683, %v686
      %v688 = vmul.f32 %v687, 1.442695
      %v689 = vpow.pop %v688
      %v690 = vsel %vm407, %v689, 0.0
      %691 = vadd.xlane.f32.xlu0 %v690
      %v692 = vpop.xlane.xlu0 %691
      %v693 = vrcp.pop %v692
      %v694 = vmul.f32 %v689, %v693
      %v695 = vpack.c.bf16 %v694, %v694
      %696 = vrot.lane.b32.xlu0 %v401, 48
      %v697 = vpop.permute.xlu0 %696
      %v699 = vsel %vm407, %v695, 0
      %v702 = vsel %vm475, %v697, 0
      %704 = vmatprep.subr.bf16.mxu0 0
      %705 = vmatpush1.bf16.msra.mxu0 %v702
      %706 = vmatprep.subr.bf16.mxu0 0
      %707 = vmatpush1.bf16.msra.mxu0 0
      %708 = vmatprep.subr.bf16.mxu0 0
      %709 = vmatpush1.bf16.msra.mxu0 0
      %710 = vmatprep.subr.bf16.mxu0 0
      %711 = vmatpush1.bf16.msra.mxu0 0
      %712 = vmatprep.subr.bf16.mxu0 0
      %713 = vmatpush1.bf16.msra.mxu0 0
      %714 = vmatprep.subr.bf16.mxu0 0
      %715 = vmatpush1.bf16.msra.mxu0 0
      %716 = vmatprep.subr.bf16.mxu0 0
      %717 = vmatpush1.bf16.msra.mxu0 0
      %718 = vmatprep.subr.bf16.mxu0 0
      %719 = vmatpush1.bf16.msra.mxu0 0
      %720 = vmatprep.subr.bf16.mxu0 0
      %721 = vmatpush1.bf16.msra.mxu0 0
      %722 = vmatprep.subr.bf16.mxu0 0
      %723 = vmatpush1.bf16.msra.mxu0 0
      %724 = vmatprep.subr.bf16.mxu0 0
      %725 = vmatpush1.bf16.msra.mxu0 0
      %726 = vmatprep.subr.bf16.mxu0 0
      %727 = vmatpush1.bf16.msra.mxu0 0
      %728 = vmatprep.subr.bf16.mxu0 0
      %729 = vmatpush1.bf16.msra.mxu0 0
      %730 = vmatprep.subr.bf16.mxu0 0
      %731 = vmatpush1.bf16.msra.mxu0 0
      %732 = vmatprep.subr.bf16.mxu0 0
      %733 = vmatpush1.bf16.msra.mxu0 0
      %734 = vmatprep.subr.bf16.mxu0 0
      %735 = vmatpush1.bf16.msra.mxu0 0
      %736 = vmatprep.mubr.bf16.mxu0 0
      %737 = vmatmul.mubr.bf16.gmra.mrb[0].mxu0 %v699
      %v738 = vpop.f32.mrb[0].mxu0
      %v739 = vadd.f32 0.0, %v738
      %v740 = vpop.f32.mrb[0].mxu0
      %v741 = vpop.f32.mrb[0].mxu0
      %v742 = vpop.f32.mrb[0].mxu0
      %743 = vdwg.mxu0
      %s744 = scalar_lea.vmem %s329, 16
      %745 = vst.msk [vmem:[%s744] sm:$0xff] %vm407, %v694
      %746 = vrot.lane.b32.xlu0 %v401, 104
      %v747 = vpop.permute.xlu0 %746
      %748 = vrot.lane.b32.xlu0 %v401, 72
      %v749 = vpop.permute.xlu0 %748
      %v751 = vsel %vm407, %v747, 0
      %v754 = vsel %vm407, %v749, 0
      %756 = vmatprep.subr.bf16.mxu0 0
      %757 = vmatpush1.bf16.xpose.msra.mxu0 %v754
      %758 = vmatprep.subr.bf16.mxu0 0
      %759 = vmatpush1.bf16.xpose.msra.mxu0 0
      %760 = vmatprep.subr.bf16.mxu0 0
      %761 = vmatpush1.bf16.xpose.msra.mxu0 0
      %762 = vmatprep.subr.bf16.mxu0 0
      %763 = vmatpush1.bf16.xpose.msra.mxu0 0
      %764 = vmatprep.subr.bf16.mxu0 0
      %765 = vmatpush1.bf16.xpose.msra.mxu0 0
      %766 = vmatprep.subr.bf16.mxu0 0
      %767 = vmatpush1.bf16.xpose.msra.mxu0 0
      %768 = vmatprep.subr.bf16.mxu0 0
      %769 = vmatpush1.bf16.xpose.msra.mxu0 0
      %770 = vmatprep.subr.bf16.mxu0 0
      %771 = vmatpush1.bf16.xpose.msra.mxu0 0
      %772 = vmatprep.subr.bf16.mxu0 0
      %773 = vmatpush1.bf16.xpose.msra.mxu0 0
      %774 = vmatprep.subr.bf16.mxu0 0
      %775 = vmatpush1.bf16.xpose.msra.mxu0 0
      %776 = vmatprep.subr.bf16.mxu0 0
      %777 = vmatpush1.bf16.xpose.msra.mxu0 0
      %778 = vmatprep.subr.bf16.mxu0 0
      %779 = vmatpush1.bf16.xpose.msra.mxu0 0
      %780 = vmatprep.subr.bf16.mxu0 0
      %781 = vmatpush1.bf16.xpose.msra.mxu0 0
      %782 = vmatprep.subr.bf16.mxu0 0
      %783 = vmatpush1.bf16.xpose.msra.mxu0 0
      %784 = vmatprep.subr.bf16.mxu0 0
      %785 = vmatpush1.bf16.xpose.msra.mxu0 0
      %786 = vmatprep.subr.bf16.mxu0 0
      %787 = vmatpush1.bf16.xpose.msra.mxu0 0
      %788 = vmatprep.mubr.bf16.mxu0 0
      %789 = vmatmul.mubr.bf16.gmra.mrb[0].mxu0 %v751
      %v790 = vpop.f32.mrb[0].mxu0
      %v791 = vadd.f32 0.0, %v790
      %v792 = vpop.f32.mrb[0].mxu0
      %v793 = vpop.f32.mrb[0].mxu0
      %v794 = vpop.f32.mrb[0].mxu0
      %795 = vdwg.mxu0
      %v796 = vsel %vm456, -1e+09, %v791
      %v797 = vsel %vm407, %v796, -inf
      %798 = vmax.xlane.f32.xlu0 %v797
      %v799 = vpop.xlane.xlu0 %798
      %v800 = vsub.f32 %v796, %v799
      %v801 = vmul.f32 %v800, 1.442695
      %v802 = vpow.pop %v801
      %v803 = vsel %vm407, %v802, 0.0
      %804 = vadd.xlane.f32.xlu0 %v803
      %v805 = vpop.xlane.xlu0 %804
      %v806 = vrcp.pop %v805
      %v807 = vmul.f32 %v802, %v806
      %v808 = vpack.c.bf16 %v807, %v807
      %809 = vrot.lane.b32.xlu0 %v401, 40
      %v810 = vpop.permute.xlu0 %809
      %v812 = vsel %vm407, %v808, 0
      %v815 = vsel %vm475, %v810, 0
      %817 = vmatprep.subr.bf16.mxu0 0
      %818 = vmatpush1.bf16.msra.mxu0 %v815
      %819 = vmatprep.subr.bf16.mxu0 0
      %820 = vmatpush1.bf16.msra.mxu0 0
      %821 = vmatprep.subr.bf16.mxu0 0
      %822 = vmatpush1.bf16.msra.mxu0 0
      %823 = vmatprep.subr.bf16.mxu0 0
      %824 = vmatpush1.bf16.msra.mxu0 0
      %825 = vmatprep.subr.bf16.mxu0 0
      %826 = vmatpush1.bf16.msra.mxu0 0
      %827 = vmatprep.subr.bf16.mxu0 0
      %828 = vmatpush1.bf16.msra.mxu0 0
      %829 = vmatprep.subr.bf16.mxu0 0
      %830 = vmatpush1.bf16.msra.mxu0 0
      %831 = vmatprep.subr.bf16.mxu0 0
      %832 = vmatpush1.bf16.msra.mxu0 0
      %833 = vmatprep.subr.bf16.mxu0 0
      %834 = vmatpush1.bf16.msra.mxu0 0
      %835 = vmatprep.subr.bf16.mxu0 0
      %836 = vmatpush1.bf16.msra.mxu0 0
      %837 = vmatprep.subr.bf16.mxu0 0
      %838 = vmatpush1.bf16.msra.mxu0 0
      %839 = vmatprep.subr.bf16.mxu0 0
      %840 = vmatpush1.bf16.msra.mxu0 0
      %841 = vmatprep.subr.bf16.mxu0 0
      %842 = vmatpush1.bf16.msra.mxu0 0
      %843 = vmatprep.subr.bf16.mxu0 0
      %844 = vmatpush1.bf16.msra.mxu0 0
      %845 = vmatprep.subr.bf16.mxu0 0
      %846 = vmatpush1.bf16.msra.mxu0 0
      %847 = vmatprep.subr.bf16.mxu0 0
      %848 = vmatpush1.bf16.msra.mxu0 0
      %849 = vmatprep.mubr.bf16.mxu0 0
      %850 = vmatmul.mubr.bf16.gmra.mrb[0].mxu0 %v812
      %v851 = vpop.f32.mrb[0].mxu0
      %v852 = vadd.f32 0.0, %v851
      %v853 = vpop.f32.mrb[0].mxu0
      %v854 = vpop.f32.mrb[0].mxu0
      %v855 = vpop.f32.mrb[0].mxu0
      %856 = vdwg.mxu0
      %s857 = scalar_lea.vmem %s329, 24
      %858 = vst.msk [vmem:[%s857] sm:$0xff] %vm407, %v807
      %860 = vrot.lane.b32.xlu0 %v626, 8
      %v861 = vpop.permute.xlu0 %860
      %864 = vrot.lane.b32.xlu0 %v739, 16
      %v865 = vpop.permute.xlu0 %864
      %868 = vrot.lane.b32.xlu0 %v852, 24
      %v869 = vpop.permute.xlu0 %868
      %v871 = vsel %vm407, %v514, %v861
      %vm872 = vcmask 130048
      %v873 = vsel %vm872, %v871, %v865
      %vm874 = vcmask 195584
      %v875 = vsel %vm874, %v873, %v869
      %v876 = vpack.c.bf16 %v875, %v875
      %vm877 = vcmask 257024
      %878 = vst.msk [vmem:[%s320] sm:$0xf] %vm877, %v876
      %p879 = scmp.lt.s32.totalorder %s21, 1
      %s880 = scalar_select %p879, %s21, 1
      %p881 = scmp.lt.s32.totalorder %s22, 1
      %s882 = scalar_select %p881, %s22, 1
      %s883 = smul.addr %s880, 2
      %s884 = sadd.s32 %s882, %s883
      %s885 = smul.addr %s884, 4
      %s886 = scalar_lea.vmem %s4, %s885
      %p887 = scmp.lt.s32.totalorder %s21, 1
      %s888 = scalar_select %p887, %s21, 1
      %p889 = scmp.lt.s32.totalorder %s22, 1
      %s890 = scalar_select %p889, %s22, 1
      %s891 = smul.addr %s890, 4
      %s892 = smul.addr %s888, 8
      %s893 = sadd.s32 %s891, %s892
      %s894 = smul.addr %s893, 8
      %s895 = scalar_lea.vmem %s5, %s894
      // Predicated region
      $region37: #{com_attention_forward.4} parent=35 // pred_check
        %p896 = pneg %p155
      $region38: #{com_attention_forward.4} parent=35 // pred_check_branch
        %898 = sbr.rel (%p896) target = $region40
      $region39: #{com_attention_forward.4} parent=35 // pred_region
        _
      $region40: #{com_attention_forward.4} parent=35 // pred_fallthru
        _
      // Predicated region
      $region41: #{com_attention_forward.4} parent=35 // pred_check
        %p899 = pneg %p183
      $region42: #{com_attention_forward.4} parent=35 // pred_check_branch
        %901 = sbr.rel (%p899) target = $region44
      $region43: #{com_attention_forward.4} parent=35 // pred_region
        _
      $region44: #{com_attention_forward.4} parent=35 // pred_fallthru
        _
    $region36: #{com_attention_forward.4} parent=5 // pred_fallthru
      _
    %p902 = scmp.le.s32.totalorder 2, %s12
    // Predicated region
    $region45: #{com_attention_forward.4} parent=5 // pred_check
      %p903 = pneg %p902
    $region46: #{com_attention_forward.4} parent=5 // pred_check_branch
      %905 = sbr.rel (%p903) target = $region48
    $region47: #{com_attention_forward.4} parent=5 // pred_region
      %s906 = ssub.s32 %s12, 2
      // Predicated region
      $region49: #{com_attention_forward.4} parent=47 // pred_check
        %p907 = pneg %p161
      $region50: #{com_attention_forward.4} parent=47 // pred_check_branch
        %909 = sbr.rel (%p907) target = $region52
      $region51: #{com_attention_forward.4} parent=47 // pred_region
        %p910 = scmp.lt.s32.totalorder %s23, 1
        %s911 = scalar_select %p910, %s23, 1
        %p912 = scmp.lt.s32.totalorder %s24, 1
        %s913 = scalar_select %p912, %s24, 1
        %s914 = smul.addr %s911, 2
        %s915 = sadd.s32 %s913, %s914
        %s916 = smul.addr %s915, 4
        %s917 = scalar_lea.vmem %s4, %s916
      $region52: #{com_attention_forward.4} parent=47 // pred_fallthru
        _
      // Predicated region
      $region53: #{com_attention_forward.4} parent=47 // pred_check
        %p918 = pneg %p189
      $region54: #{com_attention_forward.4} parent=47 // pred_check_branch
        %920 = sbr.rel (%p918) target = $region56
      $region55: #{com_attention_forward.4} parent=47 // pred_region
        %p921 = scmp.lt.s32.totalorder %s23, 1
        %s922 = scalar_select %p921, %s23, 1
        %p923 = scmp.lt.s32.totalorder %s24, 1
        %s924 = scalar_select %p923, %s24, 1
        %s925 = smul.addr %s924, 4
        %s926 = smul.addr %s922, 8
        %s927 = sadd.s32 %s925, %s926
        %s928 = smul.addr %s927, 8
        %s929 = scalar_lea.vmem %s5, %s928
      $region56: #{com_attention_forward.4} parent=47 // pred_fallthru
        _
    $region48: #{com_attention_forward.4} parent=5 // pred_fallthru
      _
  $region6: #{com_attention_forward.4} parent=0 // loop_footer
    %s16 = sadd.s32 1, %s12
  $region7: #{com_attention_forward.4} parent=0 // loop_footer_branch
    %11 = sbr.rel target = $region3
  $region8: #{com_attention_forward.4} parent=0 // loop_exit
    _

</llo_original>
